<compile_context>
chip_gen: v7x
topology: tpu7x:2x2x1
jax: 0.10.0
libtpu: 0.0.40
codegen_flags: <defaults>
</compile_context>

<pallas_src>
import functools

import jax
import jax.numpy as jnp
from jax.experimental import pallas as pl
from jax.experimental.pallas import tpu as pltpu

INPUT_SIZE = 6        # len(features)
HIDDEN = 64
NUM_LAYERS = 2
OUTPUT = 1


# ----------------------------- Pallas kernel -------------------------------
def _lstm_kernel(x_ref, w0x_ref, w0h_ref, b0_ref, w1x_ref, w1h_ref, b1_ref,
                 wfc_ref, bfc_ref, out_ref, *, B, S):
    H = HIDDEN
    G = 4 * H
    BF = jnp.bfloat16

    # Gate layout (reordered in pack_params) is [i, f, o, g]:
    # sigmoid on lanes [0, 3H), tanh on lanes [3H, 4H) -> one masked select
    # over the 2-vreg gate slab.  Mask hoisted out of the time loop.
    lane = jax.lax.broadcasted_iota(jnp.int32, (B, G), 1)
    sig_mask = lane < 3 * H

    def gates_to_hc(g, c_prev):
        act = jnp.where(sig_mask, jax.nn.sigmoid(g), jnp.tanh(g))
        i = act[:, 0 * H:1 * H]
        f = act[:, 1 * H:2 * H]
        o = act[:, 2 * H:3 * H]
        gg = act[:, 3 * H:4 * H]
        c = f * c_prev + i * gg
        h = o * jnp.tanh(c)
        return h, c

    # Hoisted layer-0 input projection: one MXU call for the whole sequence,
    # with b0 folded in (outside the recurrence).  x_ref is (S*B, D),
    # TIME-major, so each step's slab is a contiguous sublane-aligned slice.
    g0_all = (jnp.dot(x_ref[...], w0x_ref[...],
                      preferred_element_type=jnp.float32)
              + b0_ref[...])                                     # (S*B, 4H) f32

    # Hoisted bias broadcast for layer 1 (broadcast once, not per step).
    b1b = jnp.broadcast_to(b1_ref[...], (B, G))

    h0 = jnp.zeros((B, H), jnp.float32)
    c0 = jnp.zeros((B, H), jnp.float32)
    h1 = jnp.zeros((B, H), jnp.float32)
    c1 = jnp.zeros((B, H), jnp.float32)

    # Fully unrolled recurrence (S is static).  Per step the dependent chain is
    # one 64-deep bf16 matmul per layer; weights are bf16 (half the per-step
    # VMEM->MXU streaming), accumulation is f32.
    for t in range(S):
        # layer 0: recurrent contribution only (input part precomputed above),
        # contiguous static slice of the precomputed projection.
        g0 = g0_all[t * B:(t + 1) * B, :] + jnp.dot(
            h0.astype(BF), w0h_ref[...], preferred_element_type=jnp.float32)
        h0, c0 = gates_to_hc(g0, c0)

        # layer 1: split input/recurrent dots — no lane concat on the critical
        # path, and the h1 dot can overlap layer 0 of the same step.
        g1 = (jnp.dot(h0.astype(BF), w1x_ref[...],
                      preferred_element_type=jnp.float32)
              + jnp.dot(h1.astype(BF), w1h_ref[...],
                        preferred_element_type=jnp.float32)
              + b1b)
        h1, c1 = gates_to_hc(g1, c1)

    # Final fully-connected layer (K=64, N=1) on the last timestep of the top
    # layer: VPU multiply + lane reduction keeps the epilogue off the MXU.
    out_ref[...] = (jnp.sum(h1 * wfc_ref[...], axis=-1, keepdims=True)
                    + bfc_ref[...])


# --------------------------- parameter packing ------------------------------
def _reorder_gates(w, H=HIDDEN):
    """(in_dim, 4H) with PyTorch gate blocks [i, f, g, o] -> [i, f, o, g]."""
    in_dim = w.shape[0]
    w4 = w.reshape(in_dim, 4, H)
    w4 = w4[:, jnp.array([0, 1, 3, 2]), :]
    return w4.reshape(in_dim, 4 * H)


def pack_params(params):
    (wih0, whh0, b0, wih1, whh1, b1, wfc, bfc) = params
    BF = jnp.bfloat16
    # w0x is used exactly once (the hoisted input projection, ~6 KB) -> keep
    # f32; the per-step-streamed recurrent weights go bf16.
    w0x = _reorder_gates(wih0)                       # (D, 256)  f32
    w0h = _reorder_gates(whh0).astype(BF)            # (64, 256) bf16
    b0p = _reorder_gates(b0)                         # (1, 256)  f32
    w1x = _reorder_gates(wih1).astype(BF)            # (64, 256) bf16
    w1h = _reorder_gates(whh1).astype(BF)            # (64, 256) bf16
    b1p = _reorder_gates(b1)                         # (1, 256)  f32
    wfc_row = wfc.T                                  # (1, 64)   f32 (VPU FC)
    return (w0x, w0h, b0p, w1x, w1h, b1p, wfc_row, bfc)


# ------------------------------ wrapper -------------------------------------
def lstm_model_forward(x, params):
    """x: (B, S, D) batch-first float32; mirrors the PyTorch forward."""
    B, S, D = x.shape
    # Pad batch to a multiple of 8 sublanes (free: same vreg footprint, and it
    # makes every per-step slice of the projection sublane-aligned).
    Bp = max(8, ((B + 7) // 8) * 8)
    if Bp != B:
        x = jnp.pad(x, ((0, Bp - B), (0, 0), (0, 0)))
    # Time-major flatten (one cheap XLA op outside the kernel).
    x_tm = x.transpose(1, 0, 2).reshape(S * Bp, D)

    packed = pack_params(params)

    vmem = pl.BlockSpec(memory_space=pltpu.MemorySpace.VMEM)
    kernel = functools.partial(_lstm_kernel, B=Bp, S=S)
    out = pl.pallas_call(
        kernel,
        out_shape=jax.ShapeDtypeStruct((Bp, OUTPUT), jnp.float32),
        in_specs=[vmem] * 9,
        out_specs=vmem,
    )(x_tm, *packed)
    return out[:B]


# ------------------------- deterministic init -------------------------------
def init_params(key, input_size=INPUT_SIZE, hidden=HIDDEN):
    """PyTorch-style uniform(-1/sqrt(H), 1/sqrt(H)) init, deterministic."""
    k = 1.0 / jnp.sqrt(jnp.float32(hidden))
    keys = jax.random.split(key, 12)

    def u(kk, shape):
        return jax.random.uniform(kk, shape, jnp.float32, -k, k)

    # layer 0  (weights stored pre-transposed: (in_dim, 4H); gate order i,f,g,o)
    wih0 = u(keys[0], (input_size, 4 * hidden))
    whh0 = u(keys[1], (hidden, 4 * hidden))
    b0 = u(keys[2], (1, 4 * hidden)) + u(keys[3], (1, 4 * hidden))   # b_ih+b_hh
    # layer 1
    wih1 = u(keys[4], (hidden, 4 * hidden))
    whh1 = u(keys[5], (hidden, 4 * hidden))
    b1 = u(keys[6], (1, 4 * hidden)) + u(keys[7], (1, 4 * hidden))
    # fc
    wfc = u(keys[8], (hidden, OUTPUT))
    bfc = u(keys[9], (1, OUTPUT))
    return (wih0, whh0, b0, wih1, whh1, b1, wfc, bfc)


# --------------------------- pure-JAX reference ------------------------------
def reference_forward(x, params):
    (wih0, whh0, b0, wih1, whh1, b1, wfc, bfc) = params
    B, S, D = x.shape
    H = HIDDEN

    def cell(xt, h, c, wih, whh, b):
        g = xt @ wih + h @ whh + b
        i = jax.nn.sigmoid(g[:, 0:H])
        f = jax.nn.sigmoid(g[:, H:2 * H])
        gg = jnp.tanh(g[:, 2 * H:3 * H])
        o = jax.nn.sigmoid(g[:, 3 * H:4 * H])
        c = f * c + i * gg
        h = o * jnp.tanh(c)
        return h, c

    h0 = c0 = h1 = c1 = jnp.zeros((B, H), jnp.float32)
    for t in range(S):
        xt = x[:, t, :]
        h0, c0 = cell(xt, h0, c0, wih0, whh0, b0)
        h1, c1 = cell(h0, h1, c1, wih1, whh1, b1)
    return h1 @ wfc + bfc


# --------------------------------- main --------------------------------------
if __name__ == "__main__":
    key = jax.random.PRNGKey(0)
    kx, kp = jax.random.split(key)

    batch, seq = 2, 8
    x = jax.random.normal(kx, (batch, seq, INPUT_SIZE), jnp.float32)
    params = init_params(kp)

    out = lstm_model_forward(x, params)
    out = jax.block_until_ready(out)

    ref = reference_forward(x, params)
    assert out.shape == (batch, OUTPUT)
    # bf16 recurrent weights vs f32 reference: loosened tolerance.
    assert jnp.allclose(out, ref, atol=2e-2, rtol=2e-2), (out, ref)

    print("KERNEL_OK")
</pallas_src>

<mosaic_0001>
module attributes {stable_mosaic.version = 11 : i64} {
  func.func @_lstm_kernel(%arg0: memref<64x6xf32, #tpu.memory_space<vmem>>, %arg1: memref<6x256xf32, #tpu.memory_space<vmem>>, %arg2: memref<64x256xbf16, #tpu.memory_space<vmem>>, %arg3: memref<1x256xf32, #tpu.memory_space<vmem>>, %arg4: memref<64x256xbf16, #tpu.memory_space<vmem>>, %arg5: memref<64x256xbf16, #tpu.memory_space<vmem>>, %arg6: memref<1x256xf32, #tpu.memory_space<vmem>>, %arg7: memref<1x64xf32, #tpu.memory_space<vmem>>, %arg8: memref<1x1xf32, #tpu.memory_space<vmem>>, %arg9: memref<8x1xf32, #tpu.memory_space<vmem>>) attributes {dimension_semantics = [], scalar_prefetch = 0 : i64, scratch_operands = 0 : i64, tpu.core_type = #tpu.core_type<tc>} {
    %0 = tpu.iota {dimensions = array<i32: 1>} : vector<8x256xi32>
    %c192_i32 = arith.constant 192 : i32
    %1 = vector.broadcast %c192_i32 : i32 to vector<8x256xi32>
    %2 = arith.cmpi slt, %0, %1 : vector<8x256xi32>
    %c0 = arith.constant 0 : index
    %c0_0 = arith.constant 0 : index
    %3 = vector.load %arg0[%c0, %c0_0] : memref<64x6xf32, #tpu.memory_space<vmem>>, vector<64x6xf32>
    %c0_1 = arith.constant 0 : index
    %c0_2 = arith.constant 0 : index
    %4 = vector.load %arg1[%c0_1, %c0_2] : memref<6x256xf32, #tpu.memory_space<vmem>>, vector<6x256xf32>
    %cst = arith.constant dense<0.000000e+00> : vector<64x256xf32>
    %5 = tpu.matmul %3, %4, %cst {dimension_numbers = #tpu.dot_dimension_numbers<[1], [0], [0], [1], [0, 0, 1, 1], [], []>} : vector<64x6xf32>, vector<6x256xf32>, vector<64x256xf32> -> vector<64x256xf32>
    %c0_3 = arith.constant 0 : index
    %c0_4 = arith.constant 0 : index
    %6 = vector.load %arg3[%c0_3, %c0_4] : memref<1x256xf32, #tpu.memory_space<vmem>>, vector<1x256xf32>
    %7 = vector.broadcast %6 : vector<1x256xf32> to vector<64x256xf32>
    %8 = arith.addf %5, %7 : vector<64x256xf32>
    %c0_5 = arith.constant 0 : index
    %c0_6 = arith.constant 0 : index
    %9 = vector.load %arg6[%c0_5, %c0_6] : memref<1x256xf32, #tpu.memory_space<vmem>>, vector<1x256xf32>
    %10 = vector.shape_cast %9 : vector<1x256xf32> to vector<1x256xf32>
    %11 = vector.broadcast %10 : vector<1x256xf32> to vector<8x256xf32>
    %cst_7 = arith.constant 0.000000e+00 : f32
    %12 = vector.broadcast %cst_7 : f32 to vector<8x64xf32>
    %cst_8 = arith.constant 0.000000e+00 : f32
    %13 = vector.broadcast %cst_8 : f32 to vector<8x64xf32>
    %cst_9 = arith.constant 0.000000e+00 : f32
    %14 = vector.broadcast %cst_9 : f32 to vector<8x64xf32>
    %cst_10 = arith.constant 0.000000e+00 : f32
    %15 = vector.broadcast %cst_10 : f32 to vector<8x64xf32>
    %16 = vector.extract_strided_slice %8 {offsets = [0, 0], sizes = [8, 256], strides = [1, 1]} : vector<64x256xf32> to vector<8x256xf32>
    %17 = arith.truncf %12 : vector<8x64xf32> to vector<8x64xbf16>
    %c0_11 = arith.constant 0 : index
    %c0_12 = arith.constant 0 : index
    %18 = vector.load %arg2[%c0_11, %c0_12] : memref<64x256xbf16, #tpu.memory_space<vmem>>, vector<64x256xbf16>
    %cst_13 = arith.constant dense<0.000000e+00> : vector<8x256xf32>
    %19 = tpu.matmul %17, %18, %cst_13 {dimension_numbers = #tpu.dot_dimension_numbers<[1], [0], [0], [1], [0, 0, 1, 1], [], []>} : vector<8x64xbf16>, vector<64x256xbf16>, vector<8x256xf32> -> vector<8x256xf32>
    %20 = arith.addf %16, %19 : vector<8x256xf32>
    %21 = arith.negf %20 : vector<8x256xf32>
    %22 = math.exp %21 : vector<8x256xf32>
    %cst_14 = arith.constant 1.000000e+00 : f32
    %23 = vector.broadcast %cst_14 : f32 to vector<8x256xf32>
    %24 = arith.addf %23, %22 : vector<8x256xf32>
    %25 = arith.divf %23, %24 : vector<8x256xf32>
    %26 = math.tanh %20 : vector<8x256xf32>
    %27 = arith.select %2, %25, %26 : vector<8x256xi1>, vector<8x256xf32>
    %28 = vector.extract_strided_slice %27 {offsets = [0, 0], sizes = [8, 64], strides = [1, 1]} : vector<8x256xf32> to vector<8x64xf32>
    %29 = vector.extract_strided_slice %27 {offsets = [0, 64], sizes = [8, 64], strides = [1, 1]} : vector<8x256xf32> to vector<8x64xf32>
    %30 = vector.extract_strided_slice %27 {offsets = [0, 128], sizes = [8, 64], strides = [1, 1]} : vector<8x256xf32> to vector<8x64xf32>
    %31 = vector.extract_strided_slice %27 {offsets = [0, 192], sizes = [8, 64], strides = [1, 1]} : vector<8x256xf32> to vector<8x64xf32>
    %32 = arith.mulf %29, %13 : vector<8x64xf32>
    %33 = arith.mulf %28, %31 : vector<8x64xf32>
    %34 = arith.addf %32, %33 : vector<8x64xf32>
    %35 = math.tanh %34 : vector<8x64xf32>
    %36 = arith.mulf %30, %35 : vector<8x64xf32>
    %37 = arith.truncf %36 : vector<8x64xf32> to vector<8x64xbf16>
    %c0_15 = arith.constant 0 : index
    %c0_16 = arith.constant 0 : index
    %38 = vector.load %arg4[%c0_15, %c0_16] : memref<64x256xbf16, #tpu.memory_space<vmem>>, vector<64x256xbf16>
    %cst_17 = arith.constant dense<0.000000e+00> : vector<8x256xf32>
    %39 = tpu.matmul %37, %38, %cst_17 {dimension_numbers = #tpu.dot_dimension_numbers<[1], [0], [0], [1], [0, 0, 1, 1], [], []>} : vector<8x64xbf16>, vector<64x256xbf16>, vector<8x256xf32> -> vector<8x256xf32>
    %40 = arith.truncf %14 : vector<8x64xf32> to vector<8x64xbf16>
    %c0_18 = arith.constant 0 : index
    %c0_19 = arith.constant 0 : index
    %41 = vector.load %arg5[%c0_18, %c0_19] : memref<64x256xbf16, #tpu.memory_space<vmem>>, vector<64x256xbf16>
    %cst_20 = arith.constant dense<0.000000e+00> : vector<8x256xf32>
    %42 = tpu.matmul %40, %41, %cst_20 {dimension_numbers = #tpu.dot_dimension_numbers<[1], [0], [0], [1], [0, 0, 1, 1], [], []>} : vector<8x64xbf16>, vector<64x256xbf16>, vector<8x256xf32> -> vector<8x256xf32>
    %43 = arith.addf %39, %42 : vector<8x256xf32>
    %44 = arith.addf %43, %11 : vector<8x256xf32>
    %45 = arith.negf %44 : vector<8x256xf32>
    %46 = math.exp %45 : vector<8x256xf32>
    %cst_21 = arith.constant 1.000000e+00 : f32
    %47 = vector.broadcast %cst_21 : f32 to vector<8x256xf32>
    %48 = arith.addf %47, %46 : vector<8x256xf32>
    %49 = arith.divf %47, %48 : vector<8x256xf32>
    %50 = math.tanh %44 : vector<8x256xf32>
    %51 = arith.select %2, %49, %50 : vector<8x256xi1>, vector<8x256xf32>
    %52 = vector.extract_strided_slice %51 {offsets = [0, 0], sizes = [8, 64], strides = [1, 1]} : vector<8x256xf32> to vector<8x64xf32>
    %53 = vector.extract_strided_slice %51 {offsets = [0, 64], sizes = [8, 64], strides = [1, 1]} : vector<8x256xf32> to vector<8x64xf32>
    %54 = vector.extract_strided_slice %51 {offsets = [0, 128], sizes = [8, 64], strides = [1, 1]} : vector<8x256xf32> to vector<8x64xf32>
    %55 = vector.extract_strided_slice %51 {offsets = [0, 192], sizes = [8, 64], strides = [1, 1]} : vector<8x256xf32> to vector<8x64xf32>
    %56 = arith.mulf %53, %15 : vector<8x64xf32>
    %57 = arith.mulf %52, %55 : vector<8x64xf32>
    %58 = arith.addf %56, %57 : vector<8x64xf32>
    %59 = math.tanh %58 : vector<8x64xf32>
    %60 = arith.mulf %54, %59 : vector<8x64xf32>
    %61 = vector.extract_strided_slice %8 {offsets = [8, 0], sizes = [8, 256], strides = [1, 1]} : vector<64x256xf32> to vector<8x256xf32>
    %62 = arith.truncf %36 : vector<8x64xf32> to vector<8x64xbf16>
    %c0_22 = arith.constant 0 : index
    %c0_23 = arith.constant 0 : index
    %63 = vector.load %arg2[%c0_22, %c0_23] : memref<64x256xbf16, #tpu.memory_space<vmem>>, vector<64x256xbf16>
    %cst_24 = arith.constant dense<0.000000e+00> : vector<8x256xf32>
    %64 = tpu.matmul %62, %63, %cst_24 {dimension_numbers = #tpu.dot_dimension_numbers<[1], [0], [0], [1], [0, 0, 1, 1], [], []>} : vector<8x64xbf16>, vector<64x256xbf16>, vector<8x256xf32> -> vector<8x256xf32>
    %65 = arith.addf %61, %64 : vector<8x256xf32>
    %66 = arith.negf %65 : vector<8x256xf32>
    %67 = math.exp %66 : vector<8x256xf32>
    %cst_25 = arith.constant 1.000000e+00 : f32
    %68 = vector.broadcast %cst_25 : f32 to vector<8x256xf32>
    %69 = arith.addf %68, %67 : vector<8x256xf32>
    %70 = arith.divf %68, %69 : vector<8x256xf32>
    %71 = math.tanh %65 : vector<8x256xf32>
    %72 = arith.select %2, %70, %71 : vector<8x256xi1>, vector<8x256xf32>
    %73 = vector.extract_strided_slice %72 {offsets = [0, 0], sizes = [8, 64], strides = [1, 1]} : vector<8x256xf32> to vector<8x64xf32>
    %74 = vector.extract_strided_slice %72 {offsets = [0, 64], sizes = [8, 64], strides = [1, 1]} : vector<8x256xf32> to vector<8x64xf32>
    %75 = vector.extract_strided_slice %72 {offsets = [0, 128], sizes = [8, 64], strides = [1, 1]} : vector<8x256xf32> to vector<8x64xf32>
    %76 = vector.extract_strided_slice %72 {offsets = [0, 192], sizes = [8, 64], strides = [1, 1]} : vector<8x256xf32> to vector<8x64xf32>
    %77 = arith.mulf %74, %34 : vector<8x64xf32>
    %78 = arith.mulf %73, %76 : vector<8x64xf32>
    %79 = arith.addf %77, %78 : vector<8x64xf32>
    %80 = math.tanh %79 : vector<8x64xf32>
    %81 = arith.mulf %75, %80 : vector<8x64xf32>
    %82 = arith.truncf %81 : vector<8x64xf32> to vector<8x64xbf16>
    %c0_26 = arith.constant 0 : index
    %c0_27 = arith.constant 0 : index
    %83 = vector.load %arg4[%c0_26, %c0_27] : memref<64x256xbf16, #tpu.memory_space<vmem>>, vector<64x256xbf16>
    %cst_28 = arith.constant dense<0.000000e+00> : vector<8x256xf32>
    %84 = tpu.matmul %82, %83, %cst_28 {dimension_numbers = #tpu.dot_dimension_numbers<[1], [0], [0], [1], [0, 0, 1, 1], [], []>} : vector<8x64xbf16>, vector<64x256xbf16>, vector<8x256xf32> -> vector<8x256xf32>
    %85 = arith.truncf %60 : vector<8x64xf32> to vector<8x64xbf16>
    %c0_29 = arith.constant 0 : index
    %c0_30 = arith.constant 0 : index
    %86 = vector.load %arg5[%c0_29, %c0_30] : memref<64x256xbf16, #tpu.memory_space<vmem>>, vector<64x256xbf16>
    %cst_31 = arith.constant dense<0.000000e+00> : vector<8x256xf32>
    %87 = tpu.matmul %85, %86, %cst_31 {dimension_numbers = #tpu.dot_dimension_numbers<[1], [0], [0], [1], [0, 0, 1, 1], [], []>} : vector<8x64xbf16>, vector<64x256xbf16>, vector<8x256xf32> -> vector<8x256xf32>
    %88 = arith.addf %84, %87 : vector<8x256xf32>
    %89 = arith.addf %88, %11 : vector<8x256xf32>
    %90 = arith.negf %89 : vector<8x256xf32>
    %91 = math.exp %90 : vector<8x256xf32>
    %cst_32 = arith.constant 1.000000e+00 : f32
    %92 = vector.broadcast %cst_32 : f32 to vector<8x256xf32>
    %93 = arith.addf %92, %91 : vector<8x256xf32>
    %94 = arith.divf %92, %93 : vector<8x256xf32>
    %95 = math.tanh %89 : vector<8x256xf32>
    %96 = arith.select %2, %94, %95 : vector<8x256xi1>, vector<8x256xf32>
    %97 = vector.extract_strided_slice %96 {offsets = [0, 0], sizes = [8, 64], strides = [1, 1]} : vector<8x256xf32> to vector<8x64xf32>
    %98 = vector.extract_strided_slice %96 {offsets = [0, 64], sizes = [8, 64], strides = [1, 1]} : vector<8x256xf32> to vector<8x64xf32>
    %99 = vector.extract_strided_slice %96 {offsets = [0, 128], sizes = [8, 64], strides = [1, 1]} : vector<8x256xf32> to vector<8x64xf32>
    %100 = vector.extract_strided_slice %96 {offsets = [0, 192], sizes = [8, 64], strides = [1, 1]} : vector<8x256xf32> to vector<8x64xf32>
    %101 = arith.mulf %98, %58 : vector<8x64xf32>
    %102 = arith.mulf %97, %100 : vector<8x64xf32>
    %103 = arith.addf %101, %102 : vector<8x64xf32>
    %104 = math.tanh %103 : vector<8x64xf32>
    %105 = arith.mulf %99, %104 : vector<8x64xf32>
    %106 = vector.extract_strided_slice %8 {offsets = [16, 0], sizes = [8, 256], strides = [1, 1]} : vector<64x256xf32> to vector<8x256xf32>
    %107 = arith.truncf %81 : vector<8x64xf32> to vector<8x64xbf16>
    %c0_33 = arith.constant 0 : index
    %c0_34 = arith.constant 0 : index
    %108 = vector.load %arg2[%c0_33, %c0_34] : memref<64x256xbf16, #tpu.memory_space<vmem>>, vector<64x256xbf16>
    %cst_35 = arith.constant dense<0.000000e+00> : vector<8x256xf32>
    %109 = tpu.matmul %107, %108, %cst_35 {dimension_numbers = #tpu.dot_dimension_numbers<[1], [0], [0], [1], [0, 0, 1, 1], [], []>} : vector<8x64xbf16>, vector<64x256xbf16>, vector<8x256xf32> -> vector<8x256xf32>
    %110 = arith.addf %106, %109 : vector<8x256xf32>
    %111 = arith.negf %110 : vector<8x256xf32>
    %112 = math.exp %111 : vector<8x256xf32>
    %cst_36 = arith.constant 1.000000e+00 : f32
    %113 = vector.broadcast %cst_36 : f32 to vector<8x256xf32>
    %114 = arith.addf %113, %112 : vector<8x256xf32>
    %115 = arith.divf %113, %114 : vector<8x256xf32>
    %116 = math.tanh %110 : vector<8x256xf32>
    %117 = arith.select %2, %115, %116 : vector<8x256xi1>, vector<8x256xf32>
    %118 = vector.extract_strided_slice %117 {offsets = [0, 0], sizes = [8, 64], strides = [1, 1]} : vector<8x256xf32> to vector<8x64xf32>
    %119 = vector.extract_strided_slice %117 {offsets = [0, 64], sizes = [8, 64], strides = [1, 1]} : vector<8x256xf32> to vector<8x64xf32>
    %120 = vector.extract_strided_slice %117 {offsets = [0, 128], sizes = [8, 64], strides = [1, 1]} : vector<8x256xf32> to vector<8x64xf32>
    %121 = vector.extract_strided_slice %117 {offsets = [0, 192], sizes = [8, 64], strides = [1, 1]} : vector<8x256xf32> to vector<8x64xf32>
    %122 = arith.mulf %119, %79 : vector<8x64xf32>
    %123 = arith.mulf %118, %121 : vector<8x64xf32>
    %124 = arith.addf %122, %123 : vector<8x64xf32>
    %125 = math.tanh %124 : vector<8x64xf32>
    %126 = arith.mulf %120, %125 : vector<8x64xf32>
    %127 = arith.truncf %126 : vector<8x64xf32> to vector<8x64xbf16>
    %c0_37 = arith.constant 0 : index
    %c0_38 = arith.constant 0 : index
    %128 = vector.load %arg4[%c0_37, %c0_38] : memref<64x256xbf16, #tpu.memory_space<vmem>>, vector<64x256xbf16>
    %cst_39 = arith.constant dense<0.000000e+00> : vector<8x256xf32>
    %129 = tpu.matmul %127, %128, %cst_39 {dimension_numbers = #tpu.dot_dimension_numbers<[1], [0], [0], [1], [0, 0, 1, 1], [], []>} : vector<8x64xbf16>, vector<64x256xbf16>, vector<8x256xf32> -> vector<8x256xf32>
    %130 = arith.truncf %105 : vector<8x64xf32> to vector<8x64xbf16>
    %c0_40 = arith.constant 0 : index
    %c0_41 = arith.constant 0 : index
    %131 = vector.load %arg5[%c0_40, %c0_41] : memref<64x256xbf16, #tpu.memory_space<vmem>>, vector<64x256xbf16>
    %cst_42 = arith.constant dense<0.000000e+00> : vector<8x256xf32>
    %132 = tpu.matmul %130, %131, %cst_42 {dimension_numbers = #tpu.dot_dimension_numbers<[1], [0], [0], [1], [0, 0, 1, 1], [], []>} : vector<8x64xbf16>, vector<64x256xbf16>, vector<8x256xf32> -> vector<8x256xf32>
    %133 = arith.addf %129, %132 : vector<8x256xf32>
    %134 = arith.addf %133, %11 : vector<8x256xf32>
    %135 = arith.negf %134 : vector<8x256xf32>
    %136 = math.exp %135 : vector<8x256xf32>
    %cst_43 = arith.constant 1.000000e+00 : f32
    %137 = vector.broadcast %cst_43 : f32 to vector<8x256xf32>
    %138 = arith.addf %137, %136 : vector<8x256xf32>
    %139 = arith.divf %137, %138 : vector<8x256xf32>
    %140 = math.tanh %134 : vector<8x256xf32>
    %141 = arith.select %2, %139, %140 : vector<8x256xi1>, vector<8x256xf32>
    %142 = vector.extract_strided_slice %141 {offsets = [0, 0], sizes = [8, 64], strides = [1, 1]} : vector<8x256xf32> to vector<8x64xf32>
    %143 = vector.extract_strided_slice %141 {offsets = [0, 64], sizes = [8, 64], strides = [1, 1]} : vector<8x256xf32> to vector<8x64xf32>
    %144 = vector.extract_strided_slice %141 {offsets = [0, 128], sizes = [8, 64], strides = [1, 1]} : vector<8x256xf32> to vector<8x64xf32>
    %145 = vector.extract_strided_slice %141 {offsets = [0, 192], sizes = [8, 64], strides = [1, 1]} : vector<8x256xf32> to vector<8x64xf32>
    %146 = arith.mulf %143, %103 : vector<8x64xf32>
    %147 = arith.mulf %142, %145 : vector<8x64xf32>
    %148 = arith.addf %146, %147 : vector<8x64xf32>
    %149 = math.tanh %148 : vector<8x64xf32>
    %150 = arith.mulf %144, %149 : vector<8x64xf32>
    %151 = vector.extract_strided_slice %8 {offsets = [24, 0], sizes = [8, 256], strides = [1, 1]} : vector<64x256xf32> to vector<8x256xf32>
    %152 = arith.truncf %126 : vector<8x64xf32> to vector<8x64xbf16>
    %c0_44 = arith.constant 0 : index
    %c0_45 = arith.constant 0 : index
    %153 = vector.load %arg2[%c0_44, %c0_45] : memref<64x256xbf16, #tpu.memory_space<vmem>>, vector<64x256xbf16>
    %cst_46 = arith.constant dense<0.000000e+00> : vector<8x256xf32>
    %154 = tpu.matmul %152, %153, %cst_46 {dimension_numbers = #tpu.dot_dimension_numbers<[1], [0], [0], [1], [0, 0, 1, 1], [], []>} : vector<8x64xbf16>, vector<64x256xbf16>, vector<8x256xf32> -> vector<8x256xf32>
    %155 = arith.addf %151, %154 : vector<8x256xf32>
    %156 = arith.negf %155 : vector<8x256xf32>
    %157 = math.exp %156 : vector<8x256xf32>
    %cst_47 = arith.constant 1.000000e+00 : f32
    %158 = vector.broadcast %cst_47 : f32 to vector<8x256xf32>
    %159 = arith.addf %158, %157 : vector<8x256xf32>
    %160 = arith.divf %158, %159 : vector<8x256xf32>
    %161 = math.tanh %155 : vector<8x256xf32>
    %162 = arith.select %2, %160, %161 : vector<8x256xi1>, vector<8x256xf32>
    %163 = vector.extract_strided_slice %162 {offsets = [0, 0], sizes = [8, 64], strides = [1, 1]} : vector<8x256xf32> to vector<8x64xf32>
    %164 = vector.extract_strided_slice %162 {offsets = [0, 64], sizes = [8, 64], strides = [1, 1]} : vector<8x256xf32> to vector<8x64xf32>
    %165 = vector.extract_strided_slice %162 {offsets = [0, 128], sizes = [8, 64], strides = [1, 1]} : vector<8x256xf32> to vector<8x64xf32>
    %166 = vector.extract_strided_slice %162 {offsets = [0, 192], sizes = [8, 64], strides = [1, 1]} : vector<8x256xf32> to vector<8x64xf32>
    %167 = arith.mulf %164, %124 : vector<8x64xf32>
    %168 = arith.mulf %163, %166 : vector<8x64xf32>
    %169 = arith.addf %167, %168 : vector<8x64xf32>
    %170 = math.tanh %169 : vector<8x64xf32>
    %171 = arith.mulf %165, %170 : vector<8x64xf32>
    %172 = arith.truncf %171 : vector<8x64xf32> to vector<8x64xbf16>
    %c0_48 = arith.constant 0 : index
    %c0_49 = arith.constant 0 : index
    %173 = vector.load %arg4[%c0_48, %c0_49] : memref<64x256xbf16, #tpu.memory_space<vmem>>, vector<64x256xbf16>
    %cst_50 = arith.constant dense<0.000000e+00> : vector<8x256xf32>
    %174 = tpu.matmul %172, %173, %cst_50 {dimension_numbers = #tpu.dot_dimension_numbers<[1], [0], [0], [1], [0, 0, 1, 1], [], []>} : vector<8x64xbf16>, vector<64x256xbf16>, vector<8x256xf32> -> vector<8x256xf32>
    %175 = arith.truncf %150 : vector<8x64xf32> to vector<8x64xbf16>
    %c0_51 = arith.constant 0 : index
    %c0_52 = arith.constant 0 : index
    %176 = vector.load %arg5[%c0_51, %c0_52] : memref<64x256xbf16, #tpu.memory_space<vmem>>, vector<64x256xbf16>
    %cst_53 = arith.constant dense<0.000000e+00> : vector<8x256xf32>
    %177 = tpu.matmul %175, %176, %cst_53 {dimension_numbers = #tpu.dot_dimension_numbers<[1], [0], [0], [1], [0, 0, 1, 1], [], []>} : vector<8x64xbf16>, vector<64x256xbf16>, vector<8x256xf32> -> vector<8x256xf32>
    %178 = arith.addf %174, %177 : vector<8x256xf32>
    %179 = arith.addf %178, %11 : vector<8x256xf32>
    %180 = arith.negf %179 : vector<8x256xf32>
    %181 = math.exp %180 : vector<8x256xf32>
    %cst_54 = arith.constant 1.000000e+00 : f32
    %182 = vector.broadcast %cst_54 : f32 to vector<8x256xf32>
    %183 = arith.addf %182, %181 : vector<8x256xf32>
    %184 = arith.divf %182, %183 : vector<8x256xf32>
    %185 = math.tanh %179 : vector<8x256xf32>
    %186 = arith.select %2, %184, %185 : vector<8x256xi1>, vector<8x256xf32>
    %187 = vector.extract_strided_slice %186 {offsets = [0, 0], sizes = [8, 64], strides = [1, 1]} : vector<8x256xf32> to vector<8x64xf32>
    %188 = vector.extract_strided_slice %186 {offsets = [0, 64], sizes = [8, 64], strides = [1, 1]} : vector<8x256xf32> to vector<8x64xf32>
    %189 = vector.extract_strided_slice %186 {offsets = [0, 128], sizes = [8, 64], strides = [1, 1]} : vector<8x256xf32> to vector<8x64xf32>
    %190 = vector.extract_strided_slice %186 {offsets = [0, 192], sizes = [8, 64], strides = [1, 1]} : vector<8x256xf32> to vector<8x64xf32>
    %191 = arith.mulf %188, %148 : vector<8x64xf32>
    %192 = arith.mulf %187, %190 : vector<8x64xf32>
    %193 = arith.addf %191, %192 : vector<8x64xf32>
    %194 = math.tanh %193 : vector<8x64xf32>
    %195 = arith.mulf %189, %194 : vector<8x64xf32>
    %196 = vector.extract_strided_slice %8 {offsets = [32, 0], sizes = [8, 256], strides = [1, 1]} : vector<64x256xf32> to vector<8x256xf32>
    %197 = arith.truncf %171 : vector<8x64xf32> to vector<8x64xbf16>
    %c0_55 = arith.constant 0 : index
    %c0_56 = arith.constant 0 : index
    %198 = vector.load %arg2[%c0_55, %c0_56] : memref<64x256xbf16, #tpu.memory_space<vmem>>, vector<64x256xbf16>
    %cst_57 = arith.constant dense<0.000000e+00> : vector<8x256xf32>
    %199 = tpu.matmul %197, %198, %cst_57 {dimension_numbers = #tpu.dot_dimension_numbers<[1], [0], [0], [1], [0, 0, 1, 1], [], []>} : vector<8x64xbf16>, vector<64x256xbf16>, vector<8x256xf32> -> vector<8x256xf32>
    %200 = arith.addf %196, %199 : vector<8x256xf32>
    %201 = arith.negf %200 : vector<8x256xf32>
    %202 = math.exp %201 : vector<8x256xf32>
    %cst_58 = arith.constant 1.000000e+00 : f32
    %203 = vector.broadcast %cst_58 : f32 to vector<8x256xf32>
    %204 = arith.addf %203, %202 : vector<8x256xf32>
    %205 = arith.divf %203, %204 : vector<8x256xf32>
    %206 = math.tanh %200 : vector<8x256xf32>
    %207 = arith.select %2, %205, %206 : vector<8x256xi1>, vector<8x256xf32>
    %208 = vector.extract_strided_slice %207 {offsets = [0, 0], sizes = [8, 64], strides = [1, 1]} : vector<8x256xf32> to vector<8x64xf32>
    %209 = vector.extract_strided_slice %207 {offsets = [0, 64], sizes = [8, 64], strides = [1, 1]} : vector<8x256xf32> to vector<8x64xf32>
    %210 = vector.extract_strided_slice %207 {offsets = [0, 128], sizes = [8, 64], strides = [1, 1]} : vector<8x256xf32> to vector<8x64xf32>
    %211 = vector.extract_strided_slice %207 {offsets = [0, 192], sizes = [8, 64], strides = [1, 1]} : vector<8x256xf32> to vector<8x64xf32>
    %212 = arith.mulf %209, %169 : vector<8x64xf32>
    %213 = arith.mulf %208, %211 : vector<8x64xf32>
    %214 = arith.addf %212, %213 : vector<8x64xf32>
    %215 = math.tanh %214 : vector<8x64xf32>
    %216 = arith.mulf %210, %215 : vector<8x64xf32>
    %217 = arith.truncf %216 : vector<8x64xf32> to vector<8x64xbf16>
    %c0_59 = arith.constant 0 : index
    %c0_60 = arith.constant 0 : index
    %218 = vector.load %arg4[%c0_59, %c0_60] : memref<64x256xbf16, #tpu.memory_space<vmem>>, vector<64x256xbf16>
    %cst_61 = arith.constant dense<0.000000e+00> : vector<8x256xf32>
    %219 = tpu.matmul %217, %218, %cst_61 {dimension_numbers = #tpu.dot_dimension_numbers<[1], [0], [0], [1], [0, 0, 1, 1], [], []>} : vector<8x64xbf16>, vector<64x256xbf16>, vector<8x256xf32> -> vector<8x256xf32>
    %220 = arith.truncf %195 : vector<8x64xf32> to vector<8x64xbf16>
    %c0_62 = arith.constant 0 : index
    %c0_63 = arith.constant 0 : index
    %221 = vector.load %arg5[%c0_62, %c0_63] : memref<64x256xbf16, #tpu.memory_space<vmem>>, vector<64x256xbf16>
    %cst_64 = arith.constant dense<0.000000e+00> : vector<8x256xf32>
    %222 = tpu.matmul %220, %221, %cst_64 {dimension_numbers = #tpu.dot_dimension_numbers<[1], [0], [0], [1], [0, 0, 1, 1], [], []>} : vector<8x64xbf16>, vector<64x256xbf16>, vector<8x256xf32> -> vector<8x256xf32>
    %223 = arith.addf %219, %222 : vector<8x256xf32>
    %224 = arith.addf %223, %11 : vector<8x256xf32>
    %225 = arith.negf %224 : vector<8x256xf32>
    %226 = math.exp %225 : vector<8x256xf32>
    %cst_65 = arith.constant 1.000000e+00 : f32
    %227 = vector.broadcast %cst_65 : f32 to vector<8x256xf32>
    %228 = arith.addf %227, %226 : vector<8x256xf32>
    %229 = arith.divf %227, %228 : vector<8x256xf32>
    %230 = math.tanh %224 : vector<8x256xf32>
    %231 = arith.select %2, %229, %230 : vector<8x256xi1>, vector<8x256xf32>
    %232 = vector.extract_strided_slice %231 {offsets = [0, 0], sizes = [8, 64], strides = [1, 1]} : vector<8x256xf32> to vector<8x64xf32>
    %233 = vector.extract_strided_slice %231 {offsets = [0, 64], sizes = [8, 64], strides = [1, 1]} : vector<8x256xf32> to vector<8x64xf32>
    %234 = vector.extract_strided_slice %231 {offsets = [0, 128], sizes = [8, 64], strides = [1, 1]} : vector<8x256xf32> to vector<8x64xf32>
    %235 = vector.extract_strided_slice %231 {offsets = [0, 192], sizes = [8, 64], strides = [1, 1]} : vector<8x256xf32> to vector<8x64xf32>
    %236 = arith.mulf %233, %193 : vector<8x64xf32>
    %237 = arith.mulf %232, %235 : vector<8x64xf32>
    %238 = arith.addf %236, %237 : vector<8x64xf32>
    %239 = math.tanh %238 : vector<8x64xf32>
    %240 = arith.mulf %234, %239 : vector<8x64xf32>
    %241 = vector.extract_strided_slice %8 {offsets = [40, 0], sizes = [8, 256], strides = [1, 1]} : vector<64x256xf32> to vector<8x256xf32>
    %242 = arith.truncf %216 : vector<8x64xf32> to vector<8x64xbf16>
    %c0_66 = arith.constant 0 : index
    %c0_67 = arith.constant 0 : index
    %243 = vector.load %arg2[%c0_66, %c0_67] : memref<64x256xbf16, #tpu.memory_space<vmem>>, vector<64x256xbf16>
    %cst_68 = arith.constant dense<0.000000e+00> : vector<8x256xf32>
    %244 = tpu.matmul %242, %243, %cst_68 {dimension_numbers = #tpu.dot_dimension_numbers<[1], [0], [0], [1], [0, 0, 1, 1], [], []>} : vector<8x64xbf16>, vector<64x256xbf16>, vector<8x256xf32> -> vector<8x256xf32>
    %245 = arith.addf %241, %244 : vector<8x256xf32>
    %246 = arith.negf %245 : vector<8x256xf32>
    %247 = math.exp %246 : vector<8x256xf32>
    %cst_69 = arith.constant 1.000000e+00 : f32
    %248 = vector.broadcast %cst_69 : f32 to vector<8x256xf32>
    %249 = arith.addf %248, %247 : vector<8x256xf32>
    %250 = arith.divf %248, %249 : vector<8x256xf32>
    %251 = math.tanh %245 : vector<8x256xf32>
    %252 = arith.select %2, %250, %251 : vector<8x256xi1>, vector<8x256xf32>
    %253 = vector.extract_strided_slice %252 {offsets = [0, 0], sizes = [8, 64], strides = [1, 1]} : vector<8x256xf32> to vector<8x64xf32>
    %254 = vector.extract_strided_slice %252 {offsets = [0, 64], sizes = [8, 64], strides = [1, 1]} : vector<8x256xf32> to vector<8x64xf32>
    %255 = vector.extract_strided_slice %252 {offsets = [0, 128], sizes = [8, 64], strides = [1, 1]} : vector<8x256xf32> to vector<8x64xf32>
    %256 = vector.extract_strided_slice %252 {offsets = [0, 192], sizes = [8, 64], strides = [1, 1]} : vector<8x256xf32> to vector<8x64xf32>
    %257 = arith.mulf %254, %214 : vector<8x64xf32>
    %258 = arith.mulf %253, %256 : vector<8x64xf32>
    %259 = arith.addf %257, %258 : vector<8x64xf32>
    %260 = math.tanh %259 : vector<8x64xf32>
    %261 = arith.mulf %255, %260 : vector<8x64xf32>
    %262 = arith.truncf %261 : vector<8x64xf32> to vector<8x64xbf16>
    %c0_70 = arith.constant 0 : index
    %c0_71 = arith.constant 0 : index
    %263 = vector.load %arg4[%c0_70, %c0_71] : memref<64x256xbf16, #tpu.memory_space<vmem>>, vector<64x256xbf16>
    %cst_72 = arith.constant dense<0.000000e+00> : vector<8x256xf32>
    %264 = tpu.matmul %262, %263, %cst_72 {dimension_numbers = #tpu.dot_dimension_numbers<[1], [0], [0], [1], [0, 0, 1, 1], [], []>} : vector<8x64xbf16>, vector<64x256xbf16>, vector<8x256xf32> -> vector<8x256xf32>
    %265 = arith.truncf %240 : vector<8x64xf32> to vector<8x64xbf16>
    %c0_73 = arith.constant 0 : index
    %c0_74 = arith.constant 0 : index
    %266 = vector.load %arg5[%c0_73, %c0_74] : memref<64x256xbf16, #tpu.memory_space<vmem>>, vector<64x256xbf16>
    %cst_75 = arith.constant dense<0.000000e+00> : vector<8x256xf32>
    %267 = tpu.matmul %265, %266, %cst_75 {dimension_numbers = #tpu.dot_dimension_numbers<[1], [0], [0], [1], [0, 0, 1, 1], [], []>} : vector<8x64xbf16>, vector<64x256xbf16>, vector<8x256xf32> -> vector<8x256xf32>
    %268 = arith.addf %264, %267 : vector<8x256xf32>
    %269 = arith.addf %268, %11 : vector<8x256xf32>
    %270 = arith.negf %269 : vector<8x256xf32>
    %271 = math.exp %270 : vector<8x256xf32>
    %cst_76 = arith.constant 1.000000e+00 : f32
    %272 = vector.broadcast %cst_76 : f32 to vector<8x256xf32>
    %273 = arith.addf %272, %271 : vector<8x256xf32>
    %274 = arith.divf %272, %273 : vector<8x256xf32>
    %275 = math.tanh %269 : vector<8x256xf32>
    %276 = arith.select %2, %274, %275 : vector<8x256xi1>, vector<8x256xf32>
    %277 = vector.extract_strided_slice %276 {offsets = [0, 0], sizes = [8, 64], strides = [1, 1]} : vector<8x256xf32> to vector<8x64xf32>
    %278 = vector.extract_strided_slice %276 {offsets = [0, 64], sizes = [8, 64], strides = [1, 1]} : vector<8x256xf32> to vector<8x64xf32>
    %279 = vector.extract_strided_slice %276 {offsets = [0, 128], sizes = [8, 64], strides = [1, 1]} : vector<8x256xf32> to vector<8x64xf32>
    %280 = vector.extract_strided_slice %276 {offsets = [0, 192], sizes = [8, 64], strides = [1, 1]} : vector<8x256xf32> to vector<8x64xf32>
    %281 = arith.mulf %278, %238 : vector<8x64xf32>
    %282 = arith.mulf %277, %280 : vector<8x64xf32>
    %283 = arith.addf %281, %282 : vector<8x64xf32>
    %284 = math.tanh %283 : vector<8x64xf32>
    %285 = arith.mulf %279, %284 : vector<8x64xf32>
    %286 = vector.extract_strided_slice %8 {offsets = [48, 0], sizes = [8, 256], strides = [1, 1]} : vector<64x256xf32> to vector<8x256xf32>
    %287 = arith.truncf %261 : vector<8x64xf32> to vector<8x64xbf16>
    %c0_77 = arith.constant 0 : index
    %c0_78 = arith.constant 0 : index
    %288 = vector.load %arg2[%c0_77, %c0_78] : memref<64x256xbf16, #tpu.memory_space<vmem>>, vector<64x256xbf16>
    %cst_79 = arith.constant dense<0.000000e+00> : vector<8x256xf32>
    %289 = tpu.matmul %287, %288, %cst_79 {dimension_numbers = #tpu.dot_dimension_numbers<[1], [0], [0], [1], [0, 0, 1, 1], [], []>} : vector<8x64xbf16>, vector<64x256xbf16>, vector<8x256xf32> -> vector<8x256xf32>
    %290 = arith.addf %286, %289 : vector<8x256xf32>
    %291 = arith.negf %290 : vector<8x256xf32>
    %292 = math.exp %291 : vector<8x256xf32>
    %cst_80 = arith.constant 1.000000e+00 : f32
    %293 = vector.broadcast %cst_80 : f32 to vector<8x256xf32>
    %294 = arith.addf %293, %292 : vector<8x256xf32>
    %295 = arith.divf %293, %294 : vector<8x256xf32>
    %296 = math.tanh %290 : vector<8x256xf32>
    %297 = arith.select %2, %295, %296 : vector<8x256xi1>, vector<8x256xf32>
    %298 = vector.extract_strided_slice %297 {offsets = [0, 0], sizes = [8, 64], strides = [1, 1]} : vector<8x256xf32> to vector<8x64xf32>
    %299 = vector.extract_strided_slice %297 {offsets = [0, 64], sizes = [8, 64], strides = [1, 1]} : vector<8x256xf32> to vector<8x64xf32>
    %300 = vector.extract_strided_slice %297 {offsets = [0, 128], sizes = [8, 64], strides = [1, 1]} : vector<8x256xf32> to vector<8x64xf32>
    %301 = vector.extract_strided_slice %297 {offsets = [0, 192], sizes = [8, 64], strides = [1, 1]} : vector<8x256xf32> to vector<8x64xf32>
    %302 = arith.mulf %299, %259 : vector<8x64xf32>
    %303 = arith.mulf %298, %301 : vector<8x64xf32>
    %304 = arith.addf %302, %303 : vector<8x64xf32>
    %305 = math.tanh %304 : vector<8x64xf32>
    %306 = arith.mulf %300, %305 : vector<8x64xf32>
    %307 = arith.truncf %306 : vector<8x64xf32> to vector<8x64xbf16>
    %c0_81 = arith.constant 0 : index
    %c0_82 = arith.constant 0 : index
    %308 = vector.load %arg4[%c0_81, %c0_82] : memref<64x256xbf16, #tpu.memory_space<vmem>>, vector<64x256xbf16>
    %cst_83 = arith.constant dense<0.000000e+00> : vector<8x256xf32>
    %309 = tpu.matmul %307, %308, %cst_83 {dimension_numbers = #tpu.dot_dimension_numbers<[1], [0], [0], [1], [0, 0, 1, 1], [], []>} : vector<8x64xbf16>, vector<64x256xbf16>, vector<8x256xf32> -> vector<8x256xf32>
    %310 = arith.truncf %285 : vector<8x64xf32> to vector<8x64xbf16>
    %c0_84 = arith.constant 0 : index
    %c0_85 = arith.constant 0 : index
    %311 = vector.load %arg5[%c0_84, %c0_85] : memref<64x256xbf16, #tpu.memory_space<vmem>>, vector<64x256xbf16>
    %cst_86 = arith.constant dense<0.000000e+00> : vector<8x256xf32>
    %312 = tpu.matmul %310, %311, %cst_86 {dimension_numbers = #tpu.dot_dimension_numbers<[1], [0], [0], [1], [0, 0, 1, 1], [], []>} : vector<8x64xbf16>, vector<64x256xbf16>, vector<8x256xf32> -> vector<8x256xf32>
    %313 = arith.addf %309, %312 : vector<8x256xf32>
    %314 = arith.addf %313, %11 : vector<8x256xf32>
    %315 = arith.negf %314 : vector<8x256xf32>
    %316 = math.exp %315 : vector<8x256xf32>
    %cst_87 = arith.constant 1.000000e+00 : f32
    %317 = vector.broadcast %cst_87 : f32 to vector<8x256xf32>
    %318 = arith.addf %317, %316 : vector<8x256xf32>
    %319 = arith.divf %317, %318 : vector<8x256xf32>
    %320 = math.tanh %314 : vector<8x256xf32>
    %321 = arith.select %2, %319, %320 : vector<8x256xi1>, vector<8x256xf32>
    %322 = vector.extract_strided_slice %321 {offsets = [0, 0], sizes = [8, 64], strides = [1, 1]} : vector<8x256xf32> to vector<8x64xf32>
    %323 = vector.extract_strided_slice %321 {offsets = [0, 64], sizes = [8, 64], strides = [1, 1]} : vector<8x256xf32> to vector<8x64xf32>
    %324 = vector.extract_strided_slice %321 {offsets = [0, 128], sizes = [8, 64], strides = [1, 1]} : vector<8x256xf32> to vector<8x64xf32>
    %325 = vector.extract_strided_slice %321 {offsets = [0, 192], sizes = [8, 64], strides = [1, 1]} : vector<8x256xf32> to vector<8x64xf32>
    %326 = arith.mulf %323, %283 : vector<8x64xf32>
    %327 = arith.mulf %322, %325 : vector<8x64xf32>
    %328 = arith.addf %326, %327 : vector<8x64xf32>
    %329 = math.tanh %328 : vector<8x64xf32>
    %330 = arith.mulf %324, %329 : vector<8x64xf32>
    %331 = vector.extract_strided_slice %8 {offsets = [56, 0], sizes = [8, 256], strides = [1, 1]} : vector<64x256xf32> to vector<8x256xf32>
    %332 = arith.truncf %306 : vector<8x64xf32> to vector<8x64xbf16>
    %c0_88 = arith.constant 0 : index
    %c0_89 = arith.constant 0 : index
    %333 = vector.load %arg2[%c0_88, %c0_89] : memref<64x256xbf16, #tpu.memory_space<vmem>>, vector<64x256xbf16>
    %cst_90 = arith.constant dense<0.000000e+00> : vector<8x256xf32>
    %334 = tpu.matmul %332, %333, %cst_90 {dimension_numbers = #tpu.dot_dimension_numbers<[1], [0], [0], [1], [0, 0, 1, 1], [], []>} : vector<8x64xbf16>, vector<64x256xbf16>, vector<8x256xf32> -> vector<8x256xf32>
    %335 = arith.addf %331, %334 : vector<8x256xf32>
    %336 = arith.negf %335 : vector<8x256xf32>
    %337 = math.exp %336 : vector<8x256xf32>
    %cst_91 = arith.constant 1.000000e+00 : f32
    %338 = vector.broadcast %cst_91 : f32 to vector<8x256xf32>
    %339 = arith.addf %338, %337 : vector<8x256xf32>
    %340 = arith.divf %338, %339 : vector<8x256xf32>
    %341 = math.tanh %335 : vector<8x256xf32>
    %342 = arith.select %2, %340, %341 : vector<8x256xi1>, vector<8x256xf32>
    %343 = vector.extract_strided_slice %342 {offsets = [0, 0], sizes = [8, 64], strides = [1, 1]} : vector<8x256xf32> to vector<8x64xf32>
    %344 = vector.extract_strided_slice %342 {offsets = [0, 64], sizes = [8, 64], strides = [1, 1]} : vector<8x256xf32> to vector<8x64xf32>
    %345 = vector.extract_strided_slice %342 {offsets = [0, 128], sizes = [8, 64], strides = [1, 1]} : vector<8x256xf32> to vector<8x64xf32>
    %346 = vector.extract_strided_slice %342 {offsets = [0, 192], sizes = [8, 64], strides = [1, 1]} : vector<8x256xf32> to vector<8x64xf32>
    %347 = arith.mulf %344, %304 : vector<8x64xf32>
    %348 = arith.mulf %343, %346 : vector<8x64xf32>
    %349 = arith.addf %347, %348 : vector<8x64xf32>
    %350 = math.tanh %349 : vector<8x64xf32>
    %351 = arith.mulf %345, %350 : vector<8x64xf32>
    %352 = arith.truncf %351 : vector<8x64xf32> to vector<8x64xbf16>
    %c0_92 = arith.constant 0 : index
    %c0_93 = arith.constant 0 : index
    %353 = vector.load %arg4[%c0_92, %c0_93] : memref<64x256xbf16, #tpu.memory_space<vmem>>, vector<64x256xbf16>
    %cst_94 = arith.constant dense<0.000000e+00> : vector<8x256xf32>
    %354 = tpu.matmul %352, %353, %cst_94 {dimension_numbers = #tpu.dot_dimension_numbers<[1], [0], [0], [1], [0, 0, 1, 1], [], []>} : vector<8x64xbf16>, vector<64x256xbf16>, vector<8x256xf32> -> vector<8x256xf32>
    %355 = arith.truncf %330 : vector<8x64xf32> to vector<8x64xbf16>
    %c0_95 = arith.constant 0 : index
    %c0_96 = arith.constant 0 : index
    %356 = vector.load %arg5[%c0_95, %c0_96] : memref<64x256xbf16, #tpu.memory_space<vmem>>, vector<64x256xbf16>
    %cst_97 = arith.constant dense<0.000000e+00> : vector<8x256xf32>
    %357 = tpu.matmul %355, %356, %cst_97 {dimension_numbers = #tpu.dot_dimension_numbers<[1], [0], [0], [1], [0, 0, 1, 1], [], []>} : vector<8x64xbf16>, vector<64x256xbf16>, vector<8x256xf32> -> vector<8x256xf32>
    %358 = arith.addf %354, %357 : vector<8x256xf32>
    %359 = arith.addf %358, %11 : vector<8x256xf32>
    %360 = arith.negf %359 : vector<8x256xf32>
    %361 = math.exp %360 : vector<8x256xf32>
    %cst_98 = arith.constant 1.000000e+00 : f32
    %362 = vector.broadcast %cst_98 : f32 to vector<8x256xf32>
    %363 = arith.addf %362, %361 : vector<8x256xf32>
    %364 = arith.divf %362, %363 : vector<8x256xf32>
    %365 = math.tanh %359 : vector<8x256xf32>
    %366 = arith.select %2, %364, %365 : vector<8x256xi1>, vector<8x256xf32>
    %367 = vector.extract_strided_slice %366 {offsets = [0, 0], sizes = [8, 64], strides = [1, 1]} : vector<8x256xf32> to vector<8x64xf32>
    %368 = vector.extract_strided_slice %366 {offsets = [0, 64], sizes = [8, 64], strides = [1, 1]} : vector<8x256xf32> to vector<8x64xf32>
    %369 = vector.extract_strided_slice %366 {offsets = [0, 128], sizes = [8, 64], strides = [1, 1]} : vector<8x256xf32> to vector<8x64xf32>
    %370 = vector.extract_strided_slice %366 {offsets = [0, 192], sizes = [8, 64], strides = [1, 1]} : vector<8x256xf32> to vector<8x64xf32>
    %371 = arith.mulf %368, %328 : vector<8x64xf32>
    %372 = arith.mulf %367, %370 : vector<8x64xf32>
    %373 = arith.addf %371, %372 : vector<8x64xf32>
    %374 = math.tanh %373 : vector<8x64xf32>
    %375 = arith.mulf %369, %374 : vector<8x64xf32>
    %c0_99 = arith.constant 0 : index
    %c0_100 = arith.constant 0 : index
    %376 = vector.load %arg7[%c0_99, %c0_100] : memref<1x64xf32, #tpu.memory_space<vmem>>, vector<1x64xf32>
    %377 = vector.broadcast %376 : vector<1x64xf32> to vector<8x64xf32>
    %378 = arith.mulf %375, %377 : vector<8x64xf32>
    %cst_101 = arith.constant dense<0.000000e+00> : vector<8xf32>
    %379 = vector.multi_reduction <add>, %378, %cst_101 [1] : vector<8x64xf32> to vector<8xf32>
    %380 = vector.shape_cast %379 : vector<8xf32> to vector<8x1xf32>
    %c0_102 = arith.constant 0 : index
    %c0_103 = arith.constant 0 : index
    %381 = vector.load %arg8[%c0_102, %c0_103] : memref<1x1xf32, #tpu.memory_space<vmem>>, vector<1x1xf32>
    %382 = vector.broadcast %381 : vector<1x1xf32> to vector<8x1xf32>
    %383 = arith.addf %380, %382 : vector<8x1xf32>
    %c0_104 = arith.constant 0 : index
    %c0_105 = arith.constant 0 : index
    %384 = vector.load %arg9[%c0_104, %c0_105] : memref<8x1xf32, #tpu.memory_space<vmem>>, vector<8x1xf32>
    tpu.vector_store %arg9[%c0_104, %c0_105], %383 {strides = array<i32>} : memref<8x1xf32, #tpu.memory_space<vmem>>, vector<8x1xf32>,
    return
  }
}

</mosaic_0001>

<llo_original>
// kernel: tpu_custom_call.1
$region0: #{tpu_custom_call.1}
  #allocation0 [shape = 'u32[]', space=smem, size = 0x4, offset = 0x4, fixed_abs, tag = 'smem constant byte address 0x4 - core index']
  #allocation1 [shape = 'u32[144,128]{1,0:T(1,128)}', space=vmem, size = 0x12000, scoped, tag = 'internal scratch']
  #allocation2 [shape = 'f32[1,1]{1,0:T(1,128)S(1)}', space=vmem, size = 0x200, scoped, tag = 'scoped memory for tpu_custom_call.1']
  %s0 = inlined_call_operand.vmem [shape: f32[64,6], index: 0, kind: input, shape index: {}]
  %s1 = inlined_call_operand.vmem [shape: f32[6,256], index: 1, kind: input, shape index: {}]
  %s2 = inlined_call_operand.vmem [shape: bf16[64,256], index: 2, kind: input, shape index: {}]
  %s3 = inlined_call_operand.vmem [shape: f32[1,256], index: 3, kind: input, shape index: {}]
  %s4 = inlined_call_operand.hbm [shape: bf16[64,256], index: 4, kind: input, shape index: {}]
  %s5 = inlined_call_operand.hbm [shape: bf16[64,256], index: 5, kind: input, shape index: {}]
  %s6 = inlined_call_operand.vmem [shape: f32[1,256], index: 6, kind: input, shape index: {}]
  %s7 = inlined_call_operand.vmem [shape: f32[1,64], index: 7, kind: input, shape index: {}]
  %s8 = inlined_call_operand.<no memory space> [shape: f32[1,1], index: 8, kind: input, shape index: {}]
  %s9 = inlined_call_operand.vmem [shape: f32[8,1], index: 9, kind: output, shape index: {}]
  %s10 = sld [smem:[#allocation0]]
  $region54: #{tpu_custom_call.1} parent=0
    _
  %s12 = ssub.s32 1, %s10
  %s13 = scalar_select 0, %s12, %s10
  %v14 = vstv %s8
  %15 = vst [vmem:[#allocation2] sm:$0x1] %v14
  $region1: #{tpu_custom_call.1} parent=0
    #allocation3 [shape = 'u8[32768]{0}', space=vmem, size = 0x8000, scoped, tag = 'input window, operand 4, single buffered']
    #allocation4 [shape = 's32[1]{0}', space=sflag, size = 0x4, scoped, tag = 'scoped memory for tpu_custom_call.1']
    #allocation5 [shape = 'u8[32768]{0}', space=vmem, size = 0x8000, scoped, tag = 'input window, operand 5, single buffered']
    #allocation6 [shape = 's32[1]{0}', space=sflag, size = 0x4, scoped, tag = 'scoped memory for tpu_custom_call.1']
    %16 = vsyncpa [#allocation4], 0
    %17 = vsyncpa [#allocation6], 0
    // Predicated region
    $region2: #{tpu_custom_call.1} parent=1 // pred_check
      _
    $region3: #{tpu_custom_call.1} parent=1 // pred_check_branch
      %19 = sbr.rel (0) target = $region5
    $region4: #{tpu_custom_call.1} parent=1 // pred_region
      _
    $region5: #{tpu_custom_call.1} parent=1 // pred_fallthru
      _
    // Predicated region
    $region6: #{tpu_custom_call.1} parent=1 // pred_check
      _
    $region7: #{tpu_custom_call.1} parent=1 // pred_check_branch
      %21 = sbr.rel (0) target = $region9
    $region8: #{tpu_custom_call.1} parent=1 // pred_region
      _
    $region9: #{tpu_custom_call.1} parent=1 // pred_fallthru
      _
    // Predicated region
    $region10: #{tpu_custom_call.1} parent=1 // pred_check
      _
    $region11: #{tpu_custom_call.1} parent=1 // pred_check_branch
      %23 = sbr.rel (0) target = $region13
    $region12: #{tpu_custom_call.1} parent=1 // pred_region
      _
    $region13: #{tpu_custom_call.1} parent=1 // pred_fallthru
      _
    // Predicated region
    $region14: #{tpu_custom_call.1} parent=1 // pred_check
      _
    $region15: #{tpu_custom_call.1} parent=1 // pred_check_branch
      %25 = sbr.rel (0) target = $region17
    $region16: #{tpu_custom_call.1} parent=1 // pred_region
      _
    $region17: #{tpu_custom_call.1} parent=1 // pred_fallthru
      _
    // Predicated region
    $region18: #{tpu_custom_call.1} parent=1 // pred_check
      _
    $region19: #{tpu_custom_call.1} parent=1 // pred_check_branch
      %27 = sbr.rel (0) target = $region21
    $region20: #{tpu_custom_call.1} parent=1 // pred_region
      %s29 = ssub.s32 1024, 1024
      %30 = vsyncadd [#allocation4], %s29
      %s31 = sshll.u32 [#allocation3], 4
      %s32 = int_to_ptr.vmem [resolvable:$true] %s31
      %37 = dma.hbm_to_vmem [thread:$0]  %s4, 1024, %s32, [#allocation4], 128, 128, 8
    $region21: #{tpu_custom_call.1} parent=1 // pred_fallthru
      _
    // Predicated region
    $region22: #{tpu_custom_call.1} parent=1 // pred_check
      _
    $region23: #{tpu_custom_call.1} parent=1 // pred_check_branch
      %39 = sbr.rel (0) target = $region25
    $region24: #{tpu_custom_call.1} parent=1 // pred_region
      %s41 = ssub.s32 1024, 1024
      %42 = vsyncadd [#allocation6], %s41
      %s43 = sshll.u32 [#allocation5], 4
      %s44 = int_to_ptr.vmem [resolvable:$true] %s43
      %49 = dma.hbm_to_vmem [thread:$0]  %s5, 1024, %s44, [#allocation6], 128, 128, 8
    $region25: #{tpu_custom_call.1} parent=1 // pred_fallthru
      _
    // Predicated region
    $region26: #{tpu_custom_call.1} parent=1 // pred_check
      _
    $region27: #{tpu_custom_call.1} parent=1 // pred_check_branch
      %51 = sbr.rel (0) target = $region29
    $region28: #{tpu_custom_call.1} parent=1 // pred_region
      _
    $region29: #{tpu_custom_call.1} parent=1 // pred_fallthru
      _
    // Predicated region
    $region30: #{tpu_custom_call.1} parent=1 // pred_check
      _
    $region31: #{tpu_custom_call.1} parent=1 // pred_check_branch
      %53 = sbr.rel (0) target = $region33
    $region32: #{tpu_custom_call.1} parent=1 // pred_region
      _
    $region33: #{tpu_custom_call.1} parent=1 // pred_fallthru
      _
    // Predicated region
    $region34: #{tpu_custom_call.1} parent=1 // pred_check
      _
    $region35: #{tpu_custom_call.1} parent=1 // pred_check_branch
      %55 = sbr.rel (0) target = $region37
    $region36: #{tpu_custom_call.1} parent=1 // pred_region
      _
    $region37: #{tpu_custom_call.1} parent=1 // pred_fallthru
      _
    // Predicated region
    $region38: #{tpu_custom_call.1} parent=1 // pred_check
      _
    $region39: #{tpu_custom_call.1} parent=1 // pred_check_branch
      %57 = sbr.rel (0) target = $region41
    $region40: #{tpu_custom_call.1} parent=1 // pred_region
      %58 = dma.done [#allocation4], 1024
    $region41: #{tpu_custom_call.1} parent=1 // pred_fallthru
      _
    // Predicated region
    $region42: #{tpu_custom_call.1} parent=1 // pred_check
      _
    $region43: #{tpu_custom_call.1} parent=1 // pred_check_branch
      %60 = sbr.rel (0) target = $region45
    $region44: #{tpu_custom_call.1} parent=1 // pred_region
      %61 = dma.done [#allocation6], 1024
    $region45: #{tpu_custom_call.1} parent=1 // pred_fallthru
      _
    %v63 = vlaneseq
    %v64 = vand.u32 %v63, 127
    %v65 = vadd.s32 %v64, 128
    %vm66 = vcmp.lt.s32.totalorder %v64, 192
    %vm67 = vcmp.lt.s32.totalorder %v65, 192
    %v68 = vld [vmem:[%s0] sm:$0xff]
    %v69 = vld [vmem:[%s0 + $0x8] sm:$0xff]
    %v70 = vld [vmem:[%s0 + $0x10] sm:$0xff]
    %v71 = vld [vmem:[%s0 + $0x18] sm:$0xff]
    %v72 = vld [vmem:[%s0 + $0x20] sm:$0xff]
    %v73 = vld [vmem:[%s0 + $0x28] sm:$0xff]
    %v74 = vld [vmem:[%s0 + $0x30] sm:$0xff]
    %v75 = vld [vmem:[%s0 + $0x38] sm:$0xff]
    %v76 = vld [vmem:[%s1] sm:$0x3f]
    %v77 = vld [vmem:[%s1 + $0x8] sm:$0x3f]
    %v78 = vld [vmem:[%s3] sm:$0x3]
    %v80 = vlaneseq
    %v81 = vshrl.u32 %v80, 7
    %v82 = vsub.s32 0, %v81
    %v83 = vrot.slane %v78, %v82
    %v84 = vlaneseq
    %v85 = vshrl.u32 %v84, 7
    %v86 = vsub.s32 1, %v85
    %v87 = vrot.slane %v78, %v86
    %vm90 = vcmask 48128
    %v92 = vsel %vm90, %v68, 0
    %v95 = vsel %vm90, %v69, 0
    %v98 = vsel %vm90, %v70, 0
    %v101 = vsel %vm90, %v71, 0
    %v104 = vsel %vm90, %v72, 0
    %v107 = vsel %vm90, %v73, 0
    %v110 = vsel %vm90, %v74, 0
    %v113 = vsel %vm90, %v75, 0
    %vm115 = vcmask 1045504
    %v117 = vsel %vm115, %v76, 0
    %v120 = vsel %vm115, %v77, 0
    %122 = vmatprep.subr.mxu0 %v120
    %123 = vmatpush1.msra.mxu0 %v117
    %124 = vmatprep.subr.mxu0 0.0
    %125 = vmatpush1.msra.mxu0 0.0
    %126 = vmatprep.subr.mxu0 0.0
    %127 = vmatpush1.msra.mxu0 0.0
    %128 = vmatprep.subr.mxu0 0.0
    %129 = vmatpush1.msra.mxu0 0.0
    %130 = vmatprep.subr.mxu0 0.0
    %131 = vmatpush1.msra.mxu0 0.0
    %132 = vmatprep.subr.mxu0 0.0
    %133 = vmatpush1.msra.mxu0 0.0
    %134 = vmatprep.subr.mxu0 0.0
    %135 = vmatpush1.msra.mxu0 0.0
    %136 = vmatprep.subr.mxu0 0.0
    %137 = vmatpush1.msra.mxu0 0.0
    %138 = vmatprep.subr.mxu0 0.0
    %139 = vmatpush1.msra.mxu0 0.0
    %140 = vmatprep.subr.mxu0 0.0
    %141 = vmatpush1.msra.mxu0 0.0
    %142 = vmatprep.subr.mxu0 0.0
    %143 = vmatpush1.msra.mxu0 0.0
    %144 = vmatprep.subr.mxu0 0.0
    %145 = vmatpush1.msra.mxu0 0.0
    %146 = vmatprep.subr.mxu0 0.0
    %147 = vmatpush1.msra.mxu0 0.0
    %148 = vmatprep.subr.mxu0 0.0
    %149 = vmatpush1.msra.mxu0 0.0
    %150 = vmatprep.subr.mxu0 0.0
    %151 = vmatpush1.msra.mxu0 0.0
    %152 = vmatprep.subr.mxu0 0.0
    %153 = vmatpush1.msra.mxu0 0.0
    %154 = vmatprep.subr.mxu0 0.0
    %155 = vmatpush1.msra.mxu0 0.0
    %156 = vmatprep.subr.mxu0 0.0
    %157 = vmatpush1.msra.mxu0 0.0
    %158 = vmatprep.subr.mxu0 0.0
    %159 = vmatpush1.msra.mxu0 0.0
    %160 = vmatprep.subr.mxu0 0.0
    %161 = vmatpush1.msra.mxu0 0.0
    %162 = vmatprep.subr.mxu0 0.0
    %163 = vmatpush1.msra.mxu0 0.0
    %164 = vmatprep.subr.mxu0 0.0
    %165 = vmatpush1.msra.mxu0 0.0
    %166 = vmatprep.subr.mxu0 0.0
    %167 = vmatpush1.msra.mxu0 0.0
    %168 = vmatprep.subr.mxu0 0.0
    %169 = vmatpush1.msra.mxu0 0.0
    %170 = vmatprep.subr.mxu0 0.0
    %171 = vmatpush1.msra.mxu0 0.0
    %172 = vmatprep.subr.mxu0 0.0
    %173 = vmatpush1.msra.mxu0 0.0
    %174 = vmatprep.subr.mxu0 0.0
    %175 = vmatpush1.msra.mxu0 0.0
    %176 = vmatprep.subr.mxu0 0.0
    %177 = vmatpush1.msra.mxu0 0.0
    %178 = vmatprep.subr.mxu0 0.0
    %179 = vmatpush1.msra.mxu0 0.0
    %180 = vmatprep.subr.mxu0 0.0
    %181 = vmatpush1.msra.mxu0 0.0
    %182 = vmatprep.subr.mxu0 0.0
    %183 = vmatpush1.msra.mxu0 0.0
    %184 = vmatprep.subr.mxu0 0.0
    %185 = vmatpush1.msra.mxu0 0.0
    %186 = vmatprep.mubr.f32.mxu0 0.0
    %187 = vmatmul.mubr.f32.gmra.mrb[0].mxu0 %v92
    %v188 = vpop.f32.mrb[0].mxu0
    %v189 = vadd.f32 %v83, %v188
    %v190 = vpop.f32.mrb[0].mxu0
    %v191 = vadd.f32 %v87, %v190
    %192 = vmatprep.mubr.f32.mxu0 0.0
    %193 = vmatmul.mubr.f32.gmra.mrb[0].mxu0 %v95
    %v194 = vpop.f32.mrb[0].mxu0
    %v195 = vadd.f32 %v83, %v194
    %v196 = vpop.f32.mrb[0].mxu0
    %v197 = vadd.f32 %v87, %v196
    %198 = vmatprep.mubr.f32.mxu0 0.0
    %199 = vmatmul.mubr.f32.gmra.mrb[0].mxu0 %v98
    %v200 = vpop.f32.mrb[0].mxu0
    %v201 = vadd.f32 %v83, %v200
    %v202 = vpop.f32.mrb[0].mxu0
    %v203 = vadd.f32 %v87, %v202
    %204 = vmatprep.mubr.f32.mxu0 0.0
    %205 = vmatmul.mubr.f32.gmra.mrb[0].mxu0 %v101
    %v206 = vpop.f32.mrb[0].mxu0
    %v207 = vadd.f32 %v83, %v206
    %v208 = vpop.f32.mrb[0].mxu0
    %v209 = vadd.f32 %v87, %v208
    %210 = vmatprep.mubr.f32.mxu0 0.0
    %211 = vmatmul.mubr.f32.gmra.mrb[0].mxu0 %v104
    %v212 = vpop.f32.mrb[0].mxu0
    %v213 = vadd.f32 %v83, %v212
    %v214 = vpop.f32.mrb[0].mxu0
    %v215 = vadd.f32 %v87, %v214
    %216 = vmatprep.mubr.f32.mxu0 0.0
    %217 = vmatmul.mubr.f32.gmra.mrb[0].mxu0 %v107
    %v218 = vpop.f32.mrb[0].mxu0
    %v219 = vadd.f32 %v83, %v218
    %v220 = vpop.f32.mrb[0].mxu0
    %v221 = vadd.f32 %v87, %v220
    %222 = vmatprep.mubr.f32.mxu0 0.0
    %223 = vmatmul.mubr.f32.gmra.mrb[0].mxu0 %v110
    %v224 = vpop.f32.mrb[0].mxu0
    %v225 = vadd.f32 %v83, %v224
    %v226 = vpop.f32.mrb[0].mxu0
    %v227 = vadd.f32 %v87, %v226
    %228 = vmatprep.mubr.f32.mxu0 0.0
    %229 = vmatmul.mubr.f32.gmra.mrb[0].mxu0 %v113
    %v230 = vpop.f32.mrb[0].mxu0
    %v231 = vadd.f32 %v83, %v230
    %v232 = vpop.f32.mrb[0].mxu0
    %v233 = vadd.f32 %v87, %v232
    %234 = vdwg.mxu0
    %v235 = vld [vmem:[%s6] sm:$0x3]
    %v237 = vlaneseq
    %v238 = vshrl.u32 %v237, 7
    %v239 = vsub.s32 0, %v238
    %v240 = vrot.slane %v235, %v239
    %v241 = vlaneseq
    %v242 = vshrl.u32 %v241, 7
    %v243 = vsub.s32 1, %v242
    %v244 = vrot.slane %v235, %v243
    %v247 = vld [vmem:[%s2] sm:$0xff]
    %v248 = vld [vmem:[%s2 + $0x8] sm:$0xff]
    %v249 = vld [vmem:[%s2 + $0x10] sm:$0xff]
    %v250 = vld [vmem:[%s2 + $0x18] sm:$0xff]
    %v251 = vld [vmem:[%s2 + $0x20] sm:$0xff]
    %v252 = vld [vmem:[%s2 + $0x28] sm:$0xff]
    %v253 = vld [vmem:[%s2 + $0x30] sm:$0xff]
    %v254 = vld [vmem:[%s2 + $0x38] sm:$0xff]
    %v263 = vunpack.c.l.b16 %v247
    %v264 = vunpack.c.h.b16 %v247
    %v265 = vunpack.c.l.b16 %v248
    %v266 = vunpack.c.h.b16 %v248
    %v267 = vunpack.c.l.b16 %v249
    %v268 = vunpack.c.h.b16 %v249
    %v269 = vunpack.c.l.b16 %v250
    %v270 = vunpack.c.h.b16 %v250
    %v271 = vunpack.c.l.b16 %v251
    %v272 = vunpack.c.h.b16 %v251
    %v273 = vunpack.c.l.b16 %v252
    %v274 = vunpack.c.h.b16 %v252
    %v275 = vunpack.c.l.b16 %v253
    %v276 = vunpack.c.h.b16 %v253
    %v277 = vunpack.c.l.b16 %v254
    %v278 = vunpack.c.h.b16 %v254
    %v279 = vpack.c.b16 %v265, %v263
    %v280 = vpack.c.b16 %v266, %v264
    %v281 = vpack.c.b16 %v269, %v267
    %v282 = vpack.c.b16 %v270, %v268
    %v283 = vpack.c.b16 %v273, %v271
    %v284 = vpack.c.b16 %v274, %v272
    %v285 = vpack.c.b16 %v277, %v275
    %v286 = vpack.c.b16 %v278, %v276
    %vm295 = vcmask 523264
    %v297 = vsel %vm295, 0, 0
    %299 = vmatprep.subr.bf16.mxu0 %v280
    %300 = vmatpush1.bf16.msra.mxu0 %v279
    %301 = vmatprep.subr.bf16.mxu0 %v282
    %302 = vmatpush1.bf16.msra.mxu0 %v281
    %303 = vmatprep.subr.bf16.mxu0 %v284
    %304 = vmatpush1.bf16.msra.mxu0 %v283
    %305 = vmatprep.subr.bf16.mxu0 %v286
    %306 = vmatpush1.bf16.msra.mxu0 %v285
    %307 = vmatprep.subr.bf16.mxu0 0
    %308 = vmatpush1.bf16.msra.mxu0 0
    %309 = vmatprep.subr.bf16.mxu0 0
    %310 = vmatpush1.bf16.msra.mxu0 0
    %311 = vmatprep.subr.bf16.mxu0 0
    %312 = vmatpush1.bf16.msra.mxu0 0
    %313 = vmatprep.subr.bf16.mxu0 0
    %314 = vmatpush1.bf16.msra.mxu0 0
    %315 = vmatprep.subr.bf16.mxu0 0
    %316 = vmatpush1.bf16.msra.mxu0 0
    %317 = vmatprep.subr.bf16.mxu0 0
    %318 = vmatpush1.bf16.msra.mxu0 0
    %319 = vmatprep.subr.bf16.mxu0 0
    %320 = vmatpush1.bf16.msra.mxu0 0
    %321 = vmatprep.subr.bf16.mxu0 0
    %322 = vmatpush1.bf16.msra.mxu0 0
    %323 = vmatprep.subr.bf16.mxu0 0
    %324 = vmatpush1.bf16.msra.mxu0 0
    %325 = vmatprep.subr.bf16.mxu0 0
    %326 = vmatpush1.bf16.msra.mxu0 0
    %327 = vmatprep.subr.bf16.mxu0 0
    %328 = vmatpush1.bf16.msra.mxu0 0
    %329 = vmatprep.subr.bf16.mxu0 0
    %330 = vmatpush1.bf16.msra.mxu0 0
    %331 = vmatprep.mubr.bf16.mxu0 0
    %332 = vmatmul.mubr.bf16.gmra.mrb[0].mxu0 %v297
    %v333 = vpop.f32.mrb[0].mxu0
    %v334 = vadd.f32 0.0, %v333
    %v335 = vpop.f32.mrb[0].mxu0
    %v336 = vadd.f32 0.0, %v335
    %v337 = vpop.f32.mrb[0].mxu0
    %v338 = vpop.f32.mrb[0].mxu0
    %339 = vdwg.mxu0
    %v340 = vadd.f32 %v189, %v334
    %v341 = vadd.f32 %v191, %v336
    %v342 = vxor.u32 %v340, 2147483648
    %v343 = vxor.u32 %v341, 2147483648
    %v344 = vmul.f32 %v342, 1.442695
    %v345 = vpow.pop %v344
    %v346 = vmul.f32 %v343, 1.442695
    %v347 = vpow.pop %v346
    %v348 = vadd.f32 %v345, 1.0
    %v349 = vadd.f32 %v347, 1.0
    %v350 = vrcp.pop %v348
    %v351 = vmul.f32 1.0, %v350
    %v352 = vrcp.pop %v349
    %v353 = vmul.f32 1.0, %v352
    %v354 = vtanh.pop %v340
    %v355 = vtanh.pop %v341
    %v356 = vsel %vm66, %v351, %v354
    %v357 = vsel %vm67, %v353, %v355
    %v358 = vmul.f32 %v356, 0.0
    %360 = vrot.lane.b32.xlu0 %v357, 64
    %v361 = vpop.permute.xlu0 %360
    %v363 = vmul.f32 %v356, %v361
    %365 = vrot.lane.b32.xlu0 %v363, 64
    %v366 = vpop.permute.xlu0 %365
    %v368 = vadd.f32 %v358, %v366
    %v369 = vtanh.pop %v368
    %371 = vrot.lane.b32.xlu0 %v369, 64
    %v372 = vpop.permute.xlu0 %371
    %v374 = vmul.f32 %v357, %v372
    %v375 = vpack.c.bf16 %v374, %v374
    %v376 = vld [vmem:[#allocation3] sm:$0xff]
    %v377 = vld [vmem:[#allocation3 + $0x8] sm:$0xff]
    %v378 = vld [vmem:[#allocation3 + $0x10] sm:$0xff]
    %v379 = vld [vmem:[#allocation3 + $0x18] sm:$0xff]
    %v380 = vld [vmem:[#allocation3 + $0x20] sm:$0xff]
    %v381 = vld [vmem:[#allocation3 + $0x28] sm:$0xff]
    %v382 = vld [vmem:[#allocation3 + $0x30] sm:$0xff]
    %v383 = vld [vmem:[#allocation3 + $0x38] sm:$0xff]
    %v384 = vld [vmem:[#allocation5] sm:$0xff]
    %v385 = vld [vmem:[#allocation5 + $0x8] sm:$0xff]
    %v386 = vld [vmem:[#allocation5 + $0x10] sm:$0xff]
    %v387 = vld [vmem:[#allocation5 + $0x18] sm:$0xff]
    %v388 = vld [vmem:[#allocation5 + $0x20] sm:$0xff]
    %v389 = vld [vmem:[#allocation5 + $0x28] sm:$0xff]
    %v390 = vld [vmem:[#allocation5 + $0x30] sm:$0xff]
    %v391 = vld [vmem:[#allocation5 + $0x38] sm:$0xff]
    %v400 = vunpack.c.l.b16 %v384
    %v401 = vunpack.c.h.b16 %v384
    %v402 = vunpack.c.l.b16 %v385
    %v403 = vunpack.c.h.b16 %v385
    %v404 = vunpack.c.l.b16 %v386
    %v405 = vunpack.c.h.b16 %v386
    %v406 = vunpack.c.l.b16 %v387
    %v407 = vunpack.c.h.b16 %v387
    %v408 = vunpack.c.l.b16 %v388
    %v409 = vunpack.c.h.b16 %v388
    %v410 = vunpack.c.l.b16 %v389
    %v411 = vunpack.c.h.b16 %v389
    %v412 = vunpack.c.l.b16 %v390
    %v413 = vunpack.c.h.b16 %v390
    %v414 = vunpack.c.l.b16 %v391
    %v415 = vunpack.c.h.b16 %v391
    %v416 = vpack.c.b16 %v402, %v400
    %v417 = vpack.c.b16 %v403, %v401
    %v418 = vpack.c.b16 %v406, %v404
    %v419 = vpack.c.b16 %v407, %v405
    %v420 = vpack.c.b16 %v410, %v408
    %v421 = vpack.c.b16 %v411, %v409
    %v422 = vpack.c.b16 %v414, %v412
    %v423 = vpack.c.b16 %v415, %v413
    %432 = vmatprep.subr.bf16.mxu0 %v417
    %433 = vmatpush1.bf16.msra.mxu0 %v416
    %434 = vmatprep.subr.bf16.mxu0 %v419
    %435 = vmatpush1.bf16.msra.mxu0 %v418
    %436 = vmatprep.subr.bf16.mxu0 %v421
    %437 = vmatpush1.bf16.msra.mxu0 %v420
    %438 = vmatprep.subr.bf16.mxu0 %v423
    %439 = vmatpush1.bf16.msra.mxu0 %v422
    %440 = vmatprep.subr.bf16.mxu0 0
    %441 = vmatpush1.bf16.msra.mxu0 0
    %442 = vmatprep.subr.bf16.mxu0 0
    %443 = vmatpush1.bf16.msra.mxu0 0
    %444 = vmatprep.subr.bf16.mxu0 0
    %445 = vmatpush1.bf16.msra.mxu0 0
    %446 = vmatprep.subr.bf16.mxu0 0
    %447 = vmatpush1.bf16.msra.mxu0 0
    %448 = vmatprep.subr.bf16.mxu0 0
    %449 = vmatpush1.bf16.msra.mxu0 0
    %450 = vmatprep.subr.bf16.mxu0 0
    %451 = vmatpush1.bf16.msra.mxu0 0
    %452 = vmatprep.subr.bf16.mxu0 0
    %453 = vmatpush1.bf16.msra.mxu0 0
    %454 = vmatprep.subr.bf16.mxu0 0
    %455 = vmatpush1.bf16.msra.mxu0 0
    %456 = vmatprep.subr.bf16.mxu0 0
    %457 = vmatpush1.bf16.msra.mxu0 0
    %458 = vmatprep.subr.bf16.mxu0 0
    %459 = vmatpush1.bf16.msra.mxu0 0
    %460 = vmatprep.subr.bf16.mxu0 0
    %461 = vmatpush1.bf16.msra.mxu0 0
    %462 = vmatprep.subr.bf16.mxu0 0
    %463 = vmatpush1.bf16.msra.mxu0 0
    %464 = vmatprep.mubr.bf16.mxu0 0
    %465 = vmatmul.mubr.bf16.gmra.mrb[0].mxu0 %v297
    %v466 = vpop.f32.mrb[0].mxu0
    %v467 = vadd.f32 0.0, %v466
    %v468 = vpop.f32.mrb[0].mxu0
    %v469 = vadd.f32 0.0, %v468
    %v470 = vpop.f32.mrb[0].mxu0
    %v471 = vpop.f32.mrb[0].mxu0
    %472 = vdwg.mxu0
    %v481 = vunpack.c.l.b16 %v376
    %v482 = vunpack.c.h.b16 %v376
    %v483 = vunpack.c.l.b16 %v377
    %v484 = vunpack.c.h.b16 %v377
    %v485 = vunpack.c.l.b16 %v378
    %v486 = vunpack.c.h.b16 %v378
    %v487 = vunpack.c.l.b16 %v379
    %v488 = vunpack.c.h.b16 %v379
    %v489 = vunpack.c.l.b16 %v380
    %v490 = vunpack.c.h.b16 %v380
    %v491 = vunpack.c.l.b16 %v381
    %v492 = vunpack.c.h.b16 %v381
    %v493 = vunpack.c.l.b16 %v382
    %v494 = vunpack.c.h.b16 %v382
    %v495 = vunpack.c.l.b16 %v383
    %v496 = vunpack.c.h.b16 %v383
    %v497 = vpack.c.b16 %v483, %v481
    %v498 = vpack.c.b16 %v484, %v482
    %v499 = vpack.c.b16 %v487, %v485
    %v500 = vpack.c.b16 %v488, %v486
    %v501 = vpack.c.b16 %v491, %v489
    %v502 = vpack.c.b16 %v492, %v490
    %v503 = vpack.c.b16 %v495, %v493
    %v504 = vpack.c.b16 %v496, %v494
    %v514 = vsel %vm295, %v375, 0
    %516 = vmatprep.subr.bf16.mxu0 %v498
    %517 = vmatpush1.bf16.msra.mxu0 %v497
    %518 = vmatprep.subr.bf16.mxu0 %v500
    %519 = vmatpush1.bf16.msra.mxu0 %v499
    %520 = vmatprep.subr.bf16.mxu0 %v502
    %521 = vmatpush1.bf16.msra.mxu0 %v501
    %522 = vmatprep.subr.bf16.mxu0 %v504
    %523 = vmatpush1.bf16.msra.mxu0 %v503
    %524 = vmatprep.subr.bf16.mxu0 0
    %525 = vmatpush1.bf16.msra.mxu0 0
    %526 = vmatprep.subr.bf16.mxu0 0
    %527 = vmatpush1.bf16.msra.mxu0 0
    %528 = vmatprep.subr.bf16.mxu0 0
    %529 = vmatpush1.bf16.msra.mxu0 0
    %530 = vmatprep.subr.bf16.mxu0 0
    %531 = vmatpush1.bf16.msra.mxu0 0
    %532 = vmatprep.subr.bf16.mxu0 0
    %533 = vmatpush1.bf16.msra.mxu0 0
    %534 = vmatprep.subr.bf16.mxu0 0
    %535 = vmatpush1.bf16.msra.mxu0 0
    %536 = vmatprep.subr.bf16.mxu0 0
    %537 = vmatpush1.bf16.msra.mxu0 0
    %538 = vmatprep.subr.bf16.mxu0 0
    %539 = vmatpush1.bf16.msra.mxu0 0
    %540 = vmatprep.subr.bf16.mxu0 0
    %541 = vmatpush1.bf16.msra.mxu0 0
    %542 = vmatprep.subr.bf16.mxu0 0
    %543 = vmatpush1.bf16.msra.mxu0 0
    %544 = vmatprep.subr.bf16.mxu0 0
    %545 = vmatpush1.bf16.msra.mxu0 0
    %546 = vmatprep.subr.bf16.mxu0 0
    %547 = vmatpush1.bf16.msra.mxu0 0
    %548 = vmatprep.mubr.bf16.mxu0 0
    %549 = vmatmul.mubr.bf16.gmra.mrb[0].mxu0 %v514
    %v550 = vpop.f32.mrb[0].mxu0
    %v551 = vadd.f32 %v467, %v550
    %v552 = vpop.f32.mrb[0].mxu0
    %v553 = vadd.f32 %v469, %v552
    %v554 = vpop.f32.mrb[0].mxu0
    %v555 = vpop.f32.mrb[0].mxu0
    %556 = vdwg.mxu0
    %v557 = vadd.f32 %v551, %v240
    %v558 = vadd.f32 %v553, %v244
    %v559 = vxor.u32 %v557, 2147483648
    %v560 = vxor.u32 %v558, 2147483648
    %v561 = vmul.f32 %v559, 1.442695
    %v562 = vpow.pop %v561
    %v563 = vmul.f32 %v560, 1.442695
    %v564 = vpow.pop %v563
    %v565 = vadd.f32 %v562, 1.0
    %v566 = vadd.f32 %v564, 1.0
    %v567 = vrcp.pop %v565
    %v568 = vmul.f32 1.0, %v567
    %v569 = vrcp.pop %v566
    %v570 = vmul.f32 1.0, %v569
    %v571 = vtanh.pop %v557
    %v572 = vtanh.pop %v558
    %v573 = vsel %vm66, %v568, %v571
    %v574 = vsel %vm67, %v570, %v572
    %v575 = vmul.f32 %v573, 0.0
    %577 = vrot.lane.b32.xlu0 %v574, 64
    %v578 = vpop.permute.xlu0 %577
    %v580 = vmul.f32 %v573, %v578
    %582 = vrot.lane.b32.xlu0 %v580, 64
    %v583 = vpop.permute.xlu0 %582
    %v585 = vadd.f32 %v575, %v583
    %v586 = vtanh.pop %v585
    %588 = vrot.lane.b32.xlu0 %v586, 64
    %v589 = vpop.permute.xlu0 %588
    %v591 = vmul.f32 %v574, %v589
    %592 = vmatprep.subr.bf16.mxu0 %v280
    %593 = vmatpush1.bf16.msra.mxu0 %v279
    %594 = vmatprep.subr.bf16.mxu0 %v282
    %595 = vmatpush1.bf16.msra.mxu0 %v281
    %596 = vmatprep.subr.bf16.mxu0 %v284
    %597 = vmatpush1.bf16.msra.mxu0 %v283
    %598 = vmatprep.subr.bf16.mxu0 %v286
    %599 = vmatpush1.bf16.msra.mxu0 %v285
    %600 = vmatprep.subr.bf16.mxu0 0
    %601 = vmatpush1.bf16.msra.mxu0 0
    %602 = vmatprep.subr.bf16.mxu0 0
    %603 = vmatpush1.bf16.msra.mxu0 0
    %604 = vmatprep.subr.bf16.mxu0 0
    %605 = vmatpush1.bf16.msra.mxu0 0
    %606 = vmatprep.subr.bf16.mxu0 0
    %607 = vmatpush1.bf16.msra.mxu0 0
    %608 = vmatprep.subr.bf16.mxu0 0
    %609 = vmatpush1.bf16.msra.mxu0 0
    %610 = vmatprep.subr.bf16.mxu0 0
    %611 = vmatpush1.bf16.msra.mxu0 0
    %612 = vmatprep.subr.bf16.mxu0 0
    %613 = vmatpush1.bf16.msra.mxu0 0
    %614 = vmatprep.subr.bf16.mxu0 0
    %615 = vmatpush1.bf16.msra.mxu0 0
    %616 = vmatprep.subr.bf16.mxu0 0
    %617 = vmatpush1.bf16.msra.mxu0 0
    %618 = vmatprep.subr.bf16.mxu0 0
    %619 = vmatpush1.bf16.msra.mxu0 0
    %620 = vmatprep.subr.bf16.mxu0 0
    %621 = vmatpush1.bf16.msra.mxu0 0
    %622 = vmatprep.subr.bf16.mxu0 0
    %623 = vmatpush1.bf16.msra.mxu0 0
    %624 = vmatprep.mubr.bf16.mxu0 0
    %625 = vmatmul.mubr.bf16.gmra.mrb[0].mxu0 %v514
    %v626 = vpop.f32.mrb[0].mxu0
    %v627 = vadd.f32 0.0, %v626
    %v628 = vpop.f32.mrb[0].mxu0
    %v629 = vadd.f32 0.0, %v628
    %v630 = vpop.f32.mrb[0].mxu0
    %v631 = vpop.f32.mrb[0].mxu0
    %632 = vdwg.mxu0
    %v633 = vadd.f32 %v195, %v627
    %v634 = vadd.f32 %v197, %v629
    %v635 = vxor.u32 %v633, 2147483648
    %v636 = vxor.u32 %v634, 2147483648
    %v637 = vmul.f32 %v635, 1.442695
    %v638 = vpow.pop %v637
    %v639 = vmul.f32 %v636, 1.442695
    %v640 = vpow.pop %v639
    %v641 = vadd.f32 %v638, 1.0
    %v642 = vadd.f32 %v640, 1.0
    %v643 = vrcp.pop %v641
    %v644 = vmul.f32 1.0, %v643
    %v645 = vrcp.pop %v642
    %v646 = vmul.f32 1.0, %v645
    %v647 = vtanh.pop %v633
    %v648 = vtanh.pop %v634
    %v649 = vsel %vm66, %v644, %v647
    %v650 = vsel %vm67, %v646, %v648
    %v651 = vmul.f32 %v649, %v368
    %653 = vrot.lane.b32.xlu0 %v650, 64
    %v654 = vpop.permute.xlu0 %653
    %v656 = vmul.f32 %v649, %v654
    %658 = vrot.lane.b32.xlu0 %v656, 64
    %v659 = vpop.permute.xlu0 %658
    %v661 = vadd.f32 %v651, %v659
    %v662 = vtanh.pop %v661
    %664 = vrot.lane.b32.xlu0 %v662, 64
    %v665 = vpop.permute.xlu0 %664
    %v667 = vmul.f32 %v650, %v665
    %v668 = vpack.c.bf16 %v667, %v667
    %v669 = vpack.c.bf16 %v591, %v591
    %v671 = vsel %vm295, %v669, 0
    %673 = vmatprep.subr.bf16.mxu0 %v417
    %674 = vmatpush1.bf16.msra.mxu0 %v416
    %675 = vmatprep.subr.bf16.mxu0 %v419
    %676 = vmatpush1.bf16.msra.mxu0 %v418
    %677 = vmatprep.subr.bf16.mxu0 %v421
    %678 = vmatpush1.bf16.msra.mxu0 %v420
    %679 = vmatprep.subr.bf16.mxu0 %v423
    %680 = vmatpush1.bf16.msra.mxu0 %v422
    %681 = vmatprep.subr.bf16.mxu0 0
    %682 = vmatpush1.bf16.msra.mxu0 0
    %683 = vmatprep.subr.bf16.mxu0 0
    %684 = vmatpush1.bf16.msra.mxu0 0
    %685 = vmatprep.subr.bf16.mxu0 0
    %686 = vmatpush1.bf16.msra.mxu0 0
    %687 = vmatprep.subr.bf16.mxu0 0
    %688 = vmatpush1.bf16.msra.mxu0 0
    %689 = vmatprep.subr.bf16.mxu0 0
    %690 = vmatpush1.bf16.msra.mxu0 0
    %691 = vmatprep.subr.bf16.mxu0 0
    %692 = vmatpush1.bf16.msra.mxu0 0
    %693 = vmatprep.subr.bf16.mxu0 0
    %694 = vmatpush1.bf16.msra.mxu0 0
    %695 = vmatprep.subr.bf16.mxu0 0
    %696 = vmatpush1.bf16.msra.mxu0 0
    %697 = vmatprep.subr.bf16.mxu0 0
    %698 = vmatpush1.bf16.msra.mxu0 0
    %699 = vmatprep.subr.bf16.mxu0 0
    %700 = vmatpush1.bf16.msra.mxu0 0
    %701 = vmatprep.subr.bf16.mxu0 0
    %702 = vmatpush1.bf16.msra.mxu0 0
    %703 = vmatprep.subr.bf16.mxu0 0
    %704 = vmatpush1.bf16.msra.mxu0 0
    %705 = vmatprep.mubr.bf16.mxu0 0
    %706 = vmatmul.mubr.bf16.gmra.mrb[0].mxu0 %v671
    %v707 = vpop.f32.mrb[0].mxu0
    %v708 = vadd.f32 0.0, %v707
    %v709 = vpop.f32.mrb[0].mxu0
    %v710 = vadd.f32 0.0, %v709
    %v711 = vpop.f32.mrb[0].mxu0
    %v712 = vpop.f32.mrb[0].mxu0
    %713 = vdwg.mxu0
    %v715 = vsel %vm295, %v668, 0
    %717 = vmatprep.subr.bf16.mxu0 %v498
    %718 = vmatpush1.bf16.msra.mxu0 %v497
    %719 = vmatprep.subr.bf16.mxu0 %v500
    %720 = vmatpush1.bf16.msra.mxu0 %v499
    %721 = vmatprep.subr.bf16.mxu0 %v502
    %722 = vmatpush1.bf16.msra.mxu0 %v501
    %723 = vmatprep.subr.bf16.mxu0 %v504
    %724 = vmatpush1.bf16.msra.mxu0 %v503
    %725 = vmatprep.subr.bf16.mxu0 0
    %726 = vmatpush1.bf16.msra.mxu0 0
    %727 = vmatprep.subr.bf16.mxu0 0
    %728 = vmatpush1.bf16.msra.mxu0 0
    %729 = vmatprep.subr.bf16.mxu0 0
    %730 = vmatpush1.bf16.msra.mxu0 0
    %731 = vmatprep.subr.bf16.mxu0 0
    %732 = vmatpush1.bf16.msra.mxu0 0
    %733 = vmatprep.subr.bf16.mxu0 0
    %734 = vmatpush1.bf16.msra.mxu0 0
    %735 = vmatprep.subr.bf16.mxu0 0
    %736 = vmatpush1.bf16.msra.mxu0 0
    %737 = vmatprep.subr.bf16.mxu0 0
    %738 = vmatpush1.bf16.msra.mxu0 0
    %739 = vmatprep.subr.bf16.mxu0 0
    %740 = vmatpush1.bf16.msra.mxu0 0
    %741 = vmatprep.subr.bf16.mxu0 0
    %742 = vmatpush1.bf16.msra.mxu0 0
    %743 = vmatprep.subr.bf16.mxu0 0
    %744 = vmatpush1.bf16.msra.mxu0 0
    %745 = vmatprep.subr.bf16.mxu0 0
    %746 = vmatpush1.bf16.msra.mxu0 0
    %747 = vmatprep.subr.bf16.mxu0 0
    %748 = vmatpush1.bf16.msra.mxu0 0
    %749 = vmatprep.mubr.bf16.mxu0 0
    %750 = vmatmul.mubr.bf16.gmra.mrb[0].mxu0 %v715
    %v751 = vpop.f32.mrb[0].mxu0
    %v752 = vadd.f32 %v708, %v751
    %v753 = vpop.f32.mrb[0].mxu0
    %v754 = vadd.f32 %v710, %v753
    %v755 = vpop.f32.mrb[0].mxu0
    %v756 = vpop.f32.mrb[0].mxu0
    %757 = vdwg.mxu0
    %v758 = vadd.f32 %v752, %v240
    %v759 = vadd.f32 %v754, %v244
    %v760 = vxor.u32 %v758, 2147483648
    %v761 = vxor.u32 %v759, 2147483648
    %v762 = vmul.f32 %v760, 1.442695
    %v763 = vpow.pop %v762
    %v764 = vmul.f32 %v761, 1.442695
    %v765 = vpow.pop %v764
    %v766 = vadd.f32 %v763, 1.0
    %v767 = vadd.f32 %v765, 1.0
    %v768 = vrcp.pop %v766
    %v769 = vmul.f32 1.0, %v768
    %v770 = vrcp.pop %v767
    %v771 = vmul.f32 1.0, %v770
    %v772 = vtanh.pop %v758
    %v773 = vtanh.pop %v759
    %v774 = vsel %vm66, %v769, %v772
    %v775 = vsel %vm67, %v771, %v773
    %v776 = vmul.f32 %v774, %v585
    %778 = vrot.lane.b32.xlu0 %v775, 64
    %v779 = vpop.permute.xlu0 %778
    %v781 = vmul.f32 %v774, %v779
    %783 = vrot.lane.b32.xlu0 %v781, 64
    %v784 = vpop.permute.xlu0 %783
    %v786 = vadd.f32 %v776, %v784
    %v787 = vtanh.pop %v786
    %789 = vrot.lane.b32.xlu0 %v787, 64
    %v790 = vpop.permute.xlu0 %789
    %v792 = vmul.f32 %v775, %v790
    %793 = vmatprep.subr.bf16.mxu0 %v280
    %794 = vmatpush1.bf16.msra.mxu0 %v279
    %795 = vmatprep.subr.bf16.mxu0 %v282
    %796 = vmatpush1.bf16.msra.mxu0 %v281
    %797 = vmatprep.subr.bf16.mxu0 %v284
    %798 = vmatpush1.bf16.msra.mxu0 %v283
    %799 = vmatprep.subr.bf16.mxu0 %v286
    %800 = vmatpush1.bf16.msra.mxu0 %v285
    %801 = vmatprep.subr.bf16.mxu0 0
    %802 = vmatpush1.bf16.msra.mxu0 0
    %803 = vmatprep.subr.bf16.mxu0 0
    %804 = vmatpush1.bf16.msra.mxu0 0
    %805 = vmatprep.subr.bf16.mxu0 0
    %806 = vmatpush1.bf16.msra.mxu0 0
    %807 = vmatprep.subr.bf16.mxu0 0
    %808 = vmatpush1.bf16.msra.mxu0 0
    %809 = vmatprep.subr.bf16.mxu0 0
    %810 = vmatpush1.bf16.msra.mxu0 0
    %811 = vmatprep.subr.bf16.mxu0 0
    %812 = vmatpush1.bf16.msra.mxu0 0
    %813 = vmatprep.subr.bf16.mxu0 0
    %814 = vmatpush1.bf16.msra.mxu0 0
    %815 = vmatprep.subr.bf16.mxu0 0
    %816 = vmatpush1.bf16.msra.mxu0 0
    %817 = vmatprep.subr.bf16.mxu0 0
    %818 = vmatpush1.bf16.msra.mxu0 0
    %819 = vmatprep.subr.bf16.mxu0 0
    %820 = vmatpush1.bf16.msra.mxu0 0
    %821 = vmatprep.subr.bf16.mxu0 0
    %822 = vmatpush1.bf16.msra.mxu0 0
    %823 = vmatprep.subr.bf16.mxu0 0
    %824 = vmatpush1.bf16.msra.mxu0 0
    %825 = vmatprep.mubr.bf16.mxu0 0
    %826 = vmatmul.mubr.bf16.gmra.mrb[0].mxu0 %v715
    %v827 = vpop.f32.mrb[0].mxu0
    %v828 = vadd.f32 0.0, %v827
    %v829 = vpop.f32.mrb[0].mxu0
    %v830 = vadd.f32 0.0, %v829
    %v831 = vpop.f32.mrb[0].mxu0
    %v832 = vpop.f32.mrb[0].mxu0
    %833 = vdwg.mxu0
    %v834 = vadd.f32 %v201, %v828
    %v835 = vadd.f32 %v203, %v830
    %v836 = vxor.u32 %v834, 2147483648
    %v837 = vxor.u32 %v835, 2147483648
    %v838 = vmul.f32 %v836, 1.442695
    %v839 = vpow.pop %v838
    %v840 = vmul.f32 %v837, 1.442695
    %v841 = vpow.pop %v840
    %v842 = vadd.f32 %v839, 1.0
    %v843 = vadd.f32 %v841, 1.0
    %v844 = vrcp.pop %v842
    %v845 = vmul.f32 1.0, %v844
    %v846 = vrcp.pop %v843
    %v847 = vmul.f32 1.0, %v846
    %v848 = vtanh.pop %v834
    %v849 = vtanh.pop %v835
    %v850 = vsel %vm66, %v845, %v848
    %v851 = vsel %vm67, %v847, %v849
    %v852 = vmul.f32 %v850, %v661
    %854 = vrot.lane.b32.xlu0 %v851, 64
    %v855 = vpop.permute.xlu0 %854
    %v857 = vmul.f32 %v850, %v855
    %859 = vrot.lane.b32.xlu0 %v857, 64
    %v860 = vpop.permute.xlu0 %859
    %v862 = vadd.f32 %v852, %v860
    %v863 = vtanh.pop %v862
    %865 = vrot.lane.b32.xlu0 %v863, 64
    %v866 = vpop.permute.xlu0 %865
    %v868 = vmul.f32 %v851, %v866
    %v869 = vpack.c.bf16 %v868, %v868
    %v870 = vpack.c.bf16 %v792, %v792
    %v872 = vsel %vm295, %v870, 0
    %874 = vmatprep.subr.bf16.mxu0 %v417
    %875 = vmatpush1.bf16.msra.mxu0 %v416
    %876 = vmatprep.subr.bf16.mxu0 %v419
    %877 = vmatpush1.bf16.msra.mxu0 %v418
    %878 = vmatprep.subr.bf16.mxu0 %v421
    %879 = vmatpush1.bf16.msra.mxu0 %v420
    %880 = vmatprep.subr.bf16.mxu0 %v423
    %881 = vmatpush1.bf16.msra.mxu0 %v422
    %882 = vmatprep.subr.bf16.mxu0 0
    %883 = vmatpush1.bf16.msra.mxu0 0
    %884 = vmatprep.subr.bf16.mxu0 0
    %885 = vmatpush1.bf16.msra.mxu0 0
    %886 = vmatprep.subr.bf16.mxu0 0
    %887 = vmatpush1.bf16.msra.mxu0 0
    %888 = vmatprep.subr.bf16.mxu0 0
    %889 = vmatpush1.bf16.msra.mxu0 0
    %890 = vmatprep.subr.bf16.mxu0 0
    %891 = vmatpush1.bf16.msra.mxu0 0
    %892 = vmatprep.subr.bf16.mxu0 0
    %893 = vmatpush1.bf16.msra.mxu0 0
    %894 = vmatprep.subr.bf16.mxu0 0
    %895 = vmatpush1.bf16.msra.mxu0 0
    %896 = vmatprep.subr.bf16.mxu0 0
    %897 = vmatpush1.bf16.msra.mxu0 0
    %898 = vmatprep.subr.bf16.mxu0 0
    %899 = vmatpush1.bf16.msra.mxu0 0
    %900 = vmatprep.subr.bf16.mxu0 0
    %901 = vmatpush1.bf16.msra.mxu0 0
    %902 = vmatprep.subr.bf16.mxu0 0
    %903 = vmatpush1.bf16.msra.mxu0 0
    %904 = vmatprep.subr.bf16.mxu0 0
    %905 = vmatpush1.bf16.msra.mxu0 0
    %906 = vmatprep.mubr.bf16.mxu0 0
    %907 = vmatmul.mubr.bf16.gmra.mrb[0].mxu0 %v872
    %v908 = vpop.f32.mrb[0].mxu0
    %v909 = vadd.f32 0.0, %v908
    %v910 = vpop.f32.mrb[0].mxu0
    %v911 = vadd.f32 0.0, %v910
    %v912 = vpop.f32.mrb[0].mxu0
    %v913 = vpop.f32.mrb[0].mxu0
    %914 = vdwg.mxu0
    %v916 = vsel %vm295, %v869, 0
    %918 = vmatprep.subr.bf16.mxu0 %v498
    %919 = vmatpush1.bf16.msra.mxu0 %v497
    %920 = vmatprep.subr.bf16.mxu0 %v500
    %921 = vmatpush1.bf16.msra.mxu0 %v499
    %922 = vmatprep.subr.bf16.mxu0 %v502
    %923 = vmatpush1.bf16.msra.mxu0 %v501
    %924 = vmatprep.subr.bf16.mxu0 %v504
    %925 = vmatpush1.bf16.msra.mxu0 %v503
    %926 = vmatprep.subr.bf16.mxu0 0
    %927 = vmatpush1.bf16.msra.mxu0 0
    %928 = vmatprep.subr.bf16.mxu0 0
    %929 = vmatpush1.bf16.msra.mxu0 0
    %930 = vmatprep.subr.bf16.mxu0 0
    %931 = vmatpush1.bf16.msra.mxu0 0
    %932 = vmatprep.subr.bf16.mxu0 0
    %933 = vmatpush1.bf16.msra.mxu0 0
    %934 = vmatprep.subr.bf16.mxu0 0
    %935 = vmatpush1.bf16.msra.mxu0 0
    %936 = vmatprep.subr.bf16.mxu0 0
    %937 = vmatpush1.bf16.msra.mxu0 0
    %938 = vmatprep.subr.bf16.mxu0 0
    %939 = vmatpush1.bf16.msra.mxu0 0
    %940 = vmatprep.subr.bf16.mxu0 0
    %941 = vmatpush1.bf16.msra.mxu0 0
    %942 = vmatprep.subr.bf16.mxu0 0
    %943 = vmatpush1.bf16.msra.mxu0 0
    %944 = vmatprep.subr.bf16.mxu0 0
    %945 = vmatpush1.bf16.msra.mxu0 0
    %946 = vmatprep.subr.bf16.mxu0 0
    %947 = vmatpush1.bf16.msra.mxu0 0
    %948 = vmatprep.subr.bf16.mxu0 0
    %949 = vmatpush1.bf16.msra.mxu0 0
    %950 = vmatprep.mubr.bf16.mxu0 0
    %951 = vmatmul.mubr.bf16.gmra.mrb[0].mxu0 %v916
    %v952 = vpop.f32.mrb[0].mxu0
    %v953 = vadd.f32 %v909, %v952
    %v954 = vpop.f32.mrb[0].mxu0
    %v955 = vadd.f32 %v911, %v954
    %v956 = vpop.f32.mrb[0].mxu0
    %v957 = vpop.f32.mrb[0].mxu0
    %958 = vdwg.mxu0
    %v959 = vadd.f32 %v953, %v240
    %v960 = vadd.f32 %v955, %v244
    %v961 = vxor.u32 %v959, 2147483648
    %v962 = vxor.u32 %v960, 2147483648
    %v963 = vmul.f32 %v961, 1.442695
    %v964 = vpow.pop %v963
    %v965 = vmul.f32 %v962, 1.442695
    %v966 = vpow.pop %v965
    %v967 = vadd.f32 %v964, 1.0
    %v968 = vadd.f32 %v966, 1.0
    %v969 = vrcp.pop %v967
    %v970 = vmul.f32 1.0, %v969
    %v971 = vrcp.pop %v968
    %v972 = vmul.f32 1.0, %v971
    %v973 = vtanh.pop %v959
    %v974 = vtanh.pop %v960
    %v975 = vsel %vm66, %v970, %v973
    %v976 = vsel %vm67, %v972, %v974
    %v977 = vmul.f32 %v975, %v786
    %979 = vrot.lane.b32.xlu0 %v976, 64
    %v980 = vpop.permute.xlu0 %979
    %v982 = vmul.f32 %v975, %v980
    %984 = vrot.lane.b32.xlu0 %v982, 64
    %v985 = vpop.permute.xlu0 %984
    %v987 = vadd.f32 %v977, %v985
    %v988 = vtanh.pop %v987
    %990 = vrot.lane.b32.xlu0 %v988, 64
    %v991 = vpop.permute.xlu0 %990
    %v993 = vmul.f32 %v976, %v991
    %994 = vmatprep.subr.bf16.mxu0 %v280
    %995 = vmatpush1.bf16.msra.mxu0 %v279
    %996 = vmatprep.subr.bf16.mxu0 %v282
    %997 = vmatpush1.bf16.msra.mxu0 %v281
    %998 = vmatprep.subr.bf16.mxu0 %v284
    %999 = vmatpush1.bf16.msra.mxu0 %v283
    %1000 = vmatprep.subr.bf16.mxu0 %v286
    %1001 = vmatpush1.bf16.msra.mxu0 %v285
    %1002 = vmatprep.subr.bf16.mxu0 0
    %1003 = vmatpush1.bf16.msra.mxu0 0
    %1004 = vmatprep.subr.bf16.mxu0 0
    %1005 = vmatpush1.bf16.msra.mxu0 0
    %1006 = vmatprep.subr.bf16.mxu0 0
    %1007 = vmatpush1.bf16.msra.mxu0 0
    %1008 = vmatprep.subr.bf16.mxu0 0
    %1009 = vmatpush1.bf16.msra.mxu0 0
    %1010 = vmatprep.subr.bf16.mxu0 0
    %1011 = vmatpush1.bf16.msra.mxu0 0
    %1012 = vmatprep.subr.bf16.mxu0 0
    %1013 = vmatpush1.bf16.msra.mxu0 0
    %1014 = vmatprep.subr.bf16.mxu0 0
    %1015 = vmatpush1.bf16.msra.mxu0 0
    %1016 = vmatprep.subr.bf16.mxu0 0
    %1017 = vmatpush1.bf16.msra.mxu0 0
    %1018 = vmatprep.subr.bf16.mxu0 0
    %1019 = vmatpush1.bf16.msra.mxu0 0
    %1020 = vmatprep.subr.bf16.mxu0 0
    %1021 = vmatpush1.bf16.msra.mxu0 0
    %1022 = vmatprep.subr.bf16.mxu0 0
    %1023 = vmatpush1.bf16.msra.mxu0 0
    %1024 = vmatprep.subr.bf16.mxu0 0
    %1025 = vmatpush1.bf16.msra.mxu0 0
    %1026 = vmatprep.mubr.bf16.mxu0 0
    %1027 = vmatmul.mubr.bf16.gmra.mrb[0].mxu0 %v916
    %v1028 = vpop.f32.mrb[0].mxu0
    %v1029 = vadd.f32 0.0, %v1028
    %v1030 = vpop.f32.mrb[0].mxu0
    %v1031 = vadd.f32 0.0, %v1030
    %v1032 = vpop.f32.mrb[0].mxu0
    %v1033 = vpop.f32.mrb[0].mxu0
    %1034 = vdwg.mxu0
    %v1035 = vadd.f32 %v207, %v1029
    %v1036 = vadd.f32 %v209, %v1031
    %v1037 = vxor.u32 %v1035, 2147483648
    %v1038 = vxor.u32 %v1036, 2147483648
    %v1039 = vmul.f32 %v1037, 1.442695
    %v1040 = vpow.pop %v1039
    %v1041 = vmul.f32 %v1038, 1.442695
    %v1042 = vpow.pop %v1041
    %v1043 = vadd.f32 %v1040, 1.0
    %v1044 = vadd.f32 %v1042, 1.0
    %v1045 = vrcp.pop %v1043
    %v1046 = vmul.f32 1.0, %v1045
    %v1047 = vrcp.pop %v1044
    %v1048 = vmul.f32 1.0, %v1047
    %v1049 = vtanh.pop %v1035
    %v1050 = vtanh.pop %v1036
    %v1051 = vsel %vm66, %v1046, %v1049
    %v1052 = vsel %vm67, %v1048, %v1050
    %v1053 = vmul.f32 %v1051, %v862
    %1055 = vrot.lane.b32.xlu0 %v1052, 64
    %v1056 = vpop.permute.xlu0 %1055
    %v1058 = vmul.f32 %v1051, %v1056
    %1060 = vrot.lane.b32.xlu0 %v1058, 64
    %v1061 = vpop.permute.xlu0 %1060
    %v1063 = vadd.f32 %v1053, %v1061
    %v1064 = vtanh.pop %v1063
    %1066 = vrot.lane.b32.xlu0 %v1064, 64
    %v1067 = vpop.permute.xlu0 %1066
    %v1069 = vmul.f32 %v1052, %v1067
    %v1070 = vpack.c.bf16 %v1069, %v1069
    %v1071 = vpack.c.bf16 %v993, %v993
    %v1073 = vsel %vm295, %v1071, 0
    %1075 = vmatprep.subr.bf16.mxu0 %v417
    %1076 = vmatpush1.bf16.msra.mxu0 %v416
    %1077 = vmatprep.subr.bf16.mxu0 %v419
    %1078 = vmatpush1.bf16.msra.mxu0 %v418
    %1079 = vmatprep.subr.bf16.mxu0 %v421
    %1080 = vmatpush1.bf16.msra.mxu0 %v420
    %1081 = vmatprep.subr.bf16.mxu0 %v423
    %1082 = vmatpush1.bf16.msra.mxu0 %v422
    %1083 = vmatprep.subr.bf16.mxu0 0
    %1084 = vmatpush1.bf16.msra.mxu0 0
    %1085 = vmatprep.subr.bf16.mxu0 0
    %1086 = vmatpush1.bf16.msra.mxu0 0
    %1087 = vmatprep.subr.bf16.mxu0 0
    %1088 = vmatpush1.bf16.msra.mxu0 0
    %1089 = vmatprep.subr.bf16.mxu0 0
    %1090 = vmatpush1.bf16.msra.mxu0 0
    %1091 = vmatprep.subr.bf16.mxu0 0
    %1092 = vmatpush1.bf16.msra.mxu0 0
    %1093 = vmatprep.subr.bf16.mxu0 0
    %1094 = vmatpush1.bf16.msra.mxu0 0
    %1095 = vmatprep.subr.bf16.mxu0 0
    %1096 = vmatpush1.bf16.msra.mxu0 0
    %1097 = vmatprep.subr.bf16.mxu0 0
    %1098 = vmatpush1.bf16.msra.mxu0 0
    %1099 = vmatprep.subr.bf16.mxu0 0
    %1100 = vmatpush1.bf16.msra.mxu0 0
    %1101 = vmatprep.subr.bf16.mxu0 0
    %1102 = vmatpush1.bf16.msra.mxu0 0
    %1103 = vmatprep.subr.bf16.mxu0 0
    %1104 = vmatpush1.bf16.msra.mxu0 0
    %1105 = vmatprep.subr.bf16.mxu0 0
    %1106 = vmatpush1.bf16.msra.mxu0 0
    %1107 = vmatprep.mubr.bf16.mxu0 0
    %1108 = vmatmul.mubr.bf16.gmra.mrb[0].mxu0 %v1073
    %v1109 = vpop.f32.mrb[0].mxu0
    %v1110 = vadd.f32 0.0, %v1109
    %v1111 = vpop.f32.mrb[0].mxu0
    %v1112 = vadd.f32 0.0, %v1111
    %v1113 = vpop.f32.mrb[0].mxu0
    %v1114 = vpop.f32.mrb[0].mxu0
    %1115 = vdwg.mxu0
    %v1117 = vsel %vm295, %v1070, 0
    %1119 = vmatprep.subr.bf16.mxu0 %v498
    %1120 = vmatpush1.bf16.msra.mxu0 %v497
    %1121 = vmatprep.subr.bf16.mxu0 %v500
    %1122 = vmatpush1.bf16.msra.mxu0 %v499
    %1123 = vmatprep.subr.bf16.mxu0 %v502
    %1124 = vmatpush1.bf16.msra.mxu0 %v501
    %1125 = vmatprep.subr.bf16.mxu0 %v504
    %1126 = vmatpush1.bf16.msra.mxu0 %v503
    %1127 = vmatprep.subr.bf16.mxu0 0
    %1128 = vmatpush1.bf16.msra.mxu0 0
    %1129 = vmatprep.subr.bf16.mxu0 0
    %1130 = vmatpush1.bf16.msra.mxu0 0
    %1131 = vmatprep.subr.bf16.mxu0 0
    %1132 = vmatpush1.bf16.msra.mxu0 0
    %1133 = vmatprep.subr.bf16.mxu0 0
    %1134 = vmatpush1.bf16.msra.mxu0 0
    %1135 = vmatprep.subr.bf16.mxu0 0
    %1136 = vmatpush1.bf16.msra.mxu0 0
    %1137 = vmatprep.subr.bf16.mxu0 0
    %1138 = vmatpush1.bf16.msra.mxu0 0
    %1139 = vmatprep.subr.bf16.mxu0 0
    %1140 = vmatpush1.bf16.msra.mxu0 0
    %1141 = vmatprep.subr.bf16.mxu0 0
    %1142 = vmatpush1.bf16.msra.mxu0 0
    %1143 = vmatprep.subr.bf16.mxu0 0
    %1144 = vmatpush1.bf16.msra.mxu0 0
    %1145 = vmatprep.subr.bf16.mxu0 0
    %1146 = vmatpush1.bf16.msra.mxu0 0
    %1147 = vmatprep.subr.bf16.mxu0 0
    %1148 = vmatpush1.bf16.msra.mxu0 0
    %1149 = vmatprep.subr.bf16.mxu0 0
    %1150 = vmatpush1.bf16.msra.mxu0 0
    %1151 = vmatprep.mubr.bf16.mxu0 0
    %1152 = vmatmul.mubr.bf16.gmra.mrb[0].mxu0 %v1117
    %v1153 = vpop.f32.mrb[0].mxu0
    %v1154 = vadd.f32 %v1110, %v1153
    %v1155 = vpop.f32.mrb[0].mxu0
    %v1156 = vadd.f32 %v1112, %v1155
    %v1157 = vpop.f32.mrb[0].mxu0
    %v1158 = vpop.f32.mrb[0].mxu0
    %1159 = vdwg.mxu0
    %v1160 = vadd.f32 %v1154, %v240
    %v1161 = vadd.f32 %v1156, %v244
    %v1162 = vxor.u32 %v1160, 2147483648
    %v1163 = vxor.u32 %v1161, 2147483648
    %v1164 = vmul.f32 %v1162, 1.442695
    %v1165 = vpow.pop %v1164
    %v1166 = vmul.f32 %v1163, 1.442695
    %v1167 = vpow.pop %v1166
    %v1168 = vadd.f32 %v1165, 1.0
    %v1169 = vadd.f32 %v1167, 1.0
    %v1170 = vrcp.pop %v1168
    %v1171 = vmul.f32 1.0, %v1170
    %v1172 = vrcp.pop %v1169
    %v1173 = vmul.f32 1.0, %v1172
    %v1174 = vtanh.pop %v1160
    %v1175 = vtanh.pop %v1161
    %v1176 = vsel %vm66, %v1171, %v1174
    %v1177 = vsel %vm67, %v1173, %v1175
    %v1178 = vmul.f32 %v1176, %v987
    %1180 = vrot.lane.b32.xlu0 %v1177, 64
    %v1181 = vpop.permute.xlu0 %1180
    %v1183 = vmul.f32 %v1176, %v1181
    %1185 = vrot.lane.b32.xlu0 %v1183, 64
    %v1186 = vpop.permute.xlu0 %1185
    %v1188 = vadd.f32 %v1178, %v1186
    %v1189 = vtanh.pop %v1188
    %1191 = vrot.lane.b32.xlu0 %v1189, 64
    %v1192 = vpop.permute.xlu0 %1191
    %v1194 = vmul.f32 %v1177, %v1192
    %1195 = vmatprep.subr.bf16.mxu0 %v280
    %1196 = vmatpush1.bf16.msra.mxu0 %v279
    %1197 = vmatprep.subr.bf16.mxu0 %v282
    %1198 = vmatpush1.bf16.msra.mxu0 %v281
    %1199 = vmatprep.subr.bf16.mxu0 %v284
    %1200 = vmatpush1.bf16.msra.mxu0 %v283
    %1201 = vmatprep.subr.bf16.mxu0 %v286
    %1202 = vmatpush1.bf16.msra.mxu0 %v285
    %1203 = vmatprep.subr.bf16.mxu0 0
    %1204 = vmatpush1.bf16.msra.mxu0 0
    %1205 = vmatprep.subr.bf16.mxu0 0
    %1206 = vmatpush1.bf16.msra.mxu0 0
    %1207 = vmatprep.subr.bf16.mxu0 0
    %1208 = vmatpush1.bf16.msra.mxu0 0
    %1209 = vmatprep.subr.bf16.mxu0 0
    %1210 = vmatpush1.bf16.msra.mxu0 0
    %1211 = vmatprep.subr.bf16.mxu0 0
    %1212 = vmatpush1.bf16.msra.mxu0 0
    %1213 = vmatprep.subr.bf16.mxu0 0
    %1214 = vmatpush1.bf16.msra.mxu0 0
    %1215 = vmatprep.subr.bf16.mxu0 0
    %1216 = vmatpush1.bf16.msra.mxu0 0
    %1217 = vmatprep.subr.bf16.mxu0 0
    %1218 = vmatpush1.bf16.msra.mxu0 0
    %1219 = vmatprep.subr.bf16.mxu0 0
    %1220 = vmatpush1.bf16.msra.mxu0 0
    %1221 = vmatprep.subr.bf16.mxu0 0
    %1222 = vmatpush1.bf16.msra.mxu0 0
    %1223 = vmatprep.subr.bf16.mxu0 0
    %1224 = vmatpush1.bf16.msra.mxu0 0
    %1225 = vmatprep.subr.bf16.mxu0 0
    %1226 = vmatpush1.bf16.msra.mxu0 0
    %1227 = vmatprep.mubr.bf16.mxu0 0
    %1228 = vmatmul.mubr.bf16.gmra.mrb[0].mxu0 %v1117
    %v1229 = vpop.f32.mrb[0].mxu0
    %v1230 = vadd.f32 0.0, %v1229
    %v1231 = vpop.f32.mrb[0].mxu0
    %v1232 = vadd.f32 0.0, %v1231
    %v1233 = vpop.f32.mrb[0].mxu0
    %v1234 = vpop.f32.mrb[0].mxu0
    %1235 = vdwg.mxu0
    %v1236 = vadd.f32 %v213, %v1230
    %v1237 = vadd.f32 %v215, %v1232
    %v1238 = vxor.u32 %v1236, 2147483648
    %v1239 = vxor.u32 %v1237, 2147483648
    %v1240 = vmul.f32 %v1238, 1.442695
    %v1241 = vpow.pop %v1240
    %v1242 = vmul.f32 %v1239, 1.442695
    %v1243 = vpow.pop %v1242
    %v1244 = vadd.f32 %v1241, 1.0
    %v1245 = vadd.f32 %v1243, 1.0
    %v1246 = vrcp.pop %v1244
    %v1247 = vmul.f32 1.0, %v1246
    %v1248 = vrcp.pop %v1245
    %v1249 = vmul.f32 1.0, %v1248
    %v1250 = vtanh.pop %v1236
    %v1251 = vtanh.pop %v1237
    %v1252 = vsel %vm66, %v1247, %v1250
    %v1253 = vsel %vm67, %v1249, %v1251
    %v1254 = vmul.f32 %v1252, %v1063
    %1256 = vrot.lane.b32.xlu0 %v1253, 64
    %v1257 = vpop.permute.xlu0 %1256
    %v1259 = vmul.f32 %v1252, %v1257
    %1261 = vrot.lane.b32.xlu0 %v1259, 64
    %v1262 = vpop.permute.xlu0 %1261
    %v1264 = vadd.f32 %v1254, %v1262
    %v1265 = vtanh.pop %v1264
    %1267 = vrot.lane.b32.xlu0 %v1265, 64
    %v1268 = vpop.permute.xlu0 %1267
    %v1270 = vmul.f32 %v1253, %v1268
    %v1271 = vpack.c.bf16 %v1270, %v1270
    %v1272 = vpack.c.bf16 %v1194, %v1194
    %v1274 = vsel %vm295, %v1272, 0
    %1276 = vmatprep.subr.bf16.mxu0 %v417
    %1277 = vmatpush1.bf16.msra.mxu0 %v416
    %1278 = vmatprep.subr.bf16.mxu0 %v419
    %1279 = vmatpush1.bf16.msra.mxu0 %v418
    %1280 = vmatprep.subr.bf16.mxu0 %v421
    %1281 = vmatpush1.bf16.msra.mxu0 %v420
    %1282 = vmatprep.subr.bf16.mxu0 %v423
    %1283 = vmatpush1.bf16.msra.mxu0 %v422
    %1284 = vmatprep.subr.bf16.mxu0 0
    %1285 = vmatpush1.bf16.msra.mxu0 0
    %1286 = vmatprep.subr.bf16.mxu0 0
    %1287 = vmatpush1.bf16.msra.mxu0 0
    %1288 = vmatprep.subr.bf16.mxu0 0
    %1289 = vmatpush1.bf16.msra.mxu0 0
    %1290 = vmatprep.subr.bf16.mxu0 0
    %1291 = vmatpush1.bf16.msra.mxu0 0
    %1292 = vmatprep.subr.bf16.mxu0 0
    %1293 = vmatpush1.bf16.msra.mxu0 0
    %1294 = vmatprep.subr.bf16.mxu0 0
    %1295 = vmatpush1.bf16.msra.mxu0 0
    %1296 = vmatprep.subr.bf16.mxu0 0
    %1297 = vmatpush1.bf16.msra.mxu0 0
    %1298 = vmatprep.subr.bf16.mxu0 0
    %1299 = vmatpush1.bf16.msra.mxu0 0
    %1300 = vmatprep.subr.bf16.mxu0 0
    %1301 = vmatpush1.bf16.msra.mxu0 0
    %1302 = vmatprep.subr.bf16.mxu0 0
    %1303 = vmatpush1.bf16.msra.mxu0 0
    %1304 = vmatprep.subr.bf16.mxu0 0
    %1305 = vmatpush1.bf16.msra.mxu0 0
    %1306 = vmatprep.subr.bf16.mxu0 0
    %1307 = vmatpush1.bf16.msra.mxu0 0
    %1308 = vmatprep.mubr.bf16.mxu0 0
    %1309 = vmatmul.mubr.bf16.gmra.mrb[0].mxu0 %v1274
    %v1310 = vpop.f32.mrb[0].mxu0
    %v1311 = vadd.f32 0.0, %v1310
    %v1312 = vpop.f32.mrb[0].mxu0
    %v1313 = vadd.f32 0.0, %v1312
    %v1314 = vpop.f32.mrb[0].mxu0
    %v1315 = vpop.f32.mrb[0].mxu0
    %1316 = vdwg.mxu0
    %v1318 = vsel %vm295, %v1271, 0
    %1320 = vmatprep.subr.bf16.mxu0 %v498
    %1321 = vmatpush1.bf16.msra.mxu0 %v497
    %1322 = vmatprep.subr.bf16.mxu0 %v500
    %1323 = vmatpush1.bf16.msra.mxu0 %v499
    %1324 = vmatprep.subr.bf16.mxu0 %v502
    %1325 = vmatpush1.bf16.msra.mxu0 %v501
    %1326 = vmatprep.subr.bf16.mxu0 %v504
    %1327 = vmatpush1.bf16.msra.mxu0 %v503
    %1328 = vmatprep.subr.bf16.mxu0 0
    %1329 = vmatpush1.bf16.msra.mxu0 0
    %1330 = vmatprep.subr.bf16.mxu0 0
    %1331 = vmatpush1.bf16.msra.mxu0 0
    %1332 = vmatprep.subr.bf16.mxu0 0
    %1333 = vmatpush1.bf16.msra.mxu0 0
    %1334 = vmatprep.subr.bf16.mxu0 0
    %1335 = vmatpush1.bf16.msra.mxu0 0
    %1336 = vmatprep.subr.bf16.mxu0 0
    %1337 = vmatpush1.bf16.msra.mxu0 0
    %1338 = vmatprep.subr.bf16.mxu0 0
    %1339 = vmatpush1.bf16.msra.mxu0 0
    %1340 = vmatprep.subr.bf16.mxu0 0
    %1341 = vmatpush1.bf16.msra.mxu0 0
    %1342 = vmatprep.subr.bf16.mxu0 0
    %1343 = vmatpush1.bf16.msra.mxu0 0
    %1344 = vmatprep.subr.bf16.mxu0 0
    %1345 = vmatpush1.bf16.msra.mxu0 0
    %1346 = vmatprep.subr.bf16.mxu0 0
    %1347 = vmatpush1.bf16.msra.mxu0 0
    %1348 = vmatprep.subr.bf16.mxu0 0
    %1349 = vmatpush1.bf16.msra.mxu0 0
    %1350 = vmatprep.subr.bf16.mxu0 0
    %1351 = vmatpush1.bf16.msra.mxu0 0
    %1352 = vmatprep.mubr.bf16.mxu0 0
    %1353 = vmatmul.mubr.bf16.gmra.mrb[0].mxu0 %v1318
    %v1354 = vpop.f32.mrb[0].mxu0
    %v1355 = vadd.f32 %v1311, %v1354
    %v1356 = vpop.f32.mrb[0].mxu0
    %v1357 = vadd.f32 %v1313, %v1356
    %v1358 = vpop.f32.mrb[0].mxu0
    %v1359 = vpop.f32.mrb[0].mxu0
    %1360 = vdwg.mxu0
    %v1361 = vadd.f32 %v1355, %v240
    %v1362 = vadd.f32 %v1357, %v244
    %v1363 = vxor.u32 %v1361, 2147483648
    %v1364 = vxor.u32 %v1362, 2147483648
    %v1365 = vmul.f32 %v1363, 1.442695
    %v1366 = vpow.pop %v1365
    %v1367 = vmul.f32 %v1364, 1.442695
    %v1368 = vpow.pop %v1367
    %v1369 = vadd.f32 %v1366, 1.0
    %v1370 = vadd.f32 %v1368, 1.0
    %v1371 = vrcp.pop %v1369
    %v1372 = vmul.f32 1.0, %v1371
    %v1373 = vrcp.pop %v1370
    %v1374 = vmul.f32 1.0, %v1373
    %v1375 = vtanh.pop %v1361
    %v1376 = vtanh.pop %v1362
    %v1377 = vsel %vm66, %v1372, %v1375
    %v1378 = vsel %vm67, %v1374, %v1376
    %v1379 = vmul.f32 %v1377, %v1188
    %1381 = vrot.lane.b32.xlu0 %v1378, 64
    %v1382 = vpop.permute.xlu0 %1381
    %v1384 = vmul.f32 %v1377, %v1382
    %1386 = vrot.lane.b32.xlu0 %v1384, 64
    %v1387 = vpop.permute.xlu0 %1386
    %v1389 = vadd.f32 %v1379, %v1387
    %v1390 = vtanh.pop %v1389
    %1392 = vrot.lane.b32.xlu0 %v1390, 64
    %v1393 = vpop.permute.xlu0 %1392
    %v1395 = vmul.f32 %v1378, %v1393
    %1396 = vmatprep.subr.bf16.mxu0 %v280
    %1397 = vmatpush1.bf16.msra.mxu0 %v279
    %1398 = vmatprep.subr.bf16.mxu0 %v282
    %1399 = vmatpush1.bf16.msra.mxu0 %v281
    %1400 = vmatprep.subr.bf16.mxu0 %v284
    %1401 = vmatpush1.bf16.msra.mxu0 %v283
    %1402 = vmatprep.subr.bf16.mxu0 %v286
    %1403 = vmatpush1.bf16.msra.mxu0 %v285
    %1404 = vmatprep.subr.bf16.mxu0 0
    %1405 = vmatpush1.bf16.msra.mxu0 0
    %1406 = vmatprep.subr.bf16.mxu0 0
    %1407 = vmatpush1.bf16.msra.mxu0 0
    %1408 = vmatprep.subr.bf16.mxu0 0
    %1409 = vmatpush1.bf16.msra.mxu0 0
    %1410 = vmatprep.subr.bf16.mxu0 0
    %1411 = vmatpush1.bf16.msra.mxu0 0
    %1412 = vmatprep.subr.bf16.mxu0 0
    %1413 = vmatpush1.bf16.msra.mxu0 0
    %1414 = vmatprep.subr.bf16.mxu0 0
    %1415 = vmatpush1.bf16.msra.mxu0 0
    %1416 = vmatprep.subr.bf16.mxu0 0
    %1417 = vmatpush1.bf16.msra.mxu0 0
    %1418 = vmatprep.subr.bf16.mxu0 0
    %1419 = vmatpush1.bf16.msra.mxu0 0
    %1420 = vmatprep.subr.bf16.mxu0 0
    %1421 = vmatpush1.bf16.msra.mxu0 0
    %1422 = vmatprep.subr.bf16.mxu0 0
    %1423 = vmatpush1.bf16.msra.mxu0 0
    %1424 = vmatprep.subr.bf16.mxu0 0
    %1425 = vmatpush1.bf16.msra.mxu0 0
    %1426 = vmatprep.subr.bf16.mxu0 0
    %1427 = vmatpush1.bf16.msra.mxu0 0
    %1428 = vmatprep.mubr.bf16.mxu0 0
    %1429 = vmatmul.mubr.bf16.gmra.mrb[0].mxu0 %v1318
    %v1430 = vpop.f32.mrb[0].mxu0
    %v1431 = vadd.f32 0.0, %v1430
    %v1432 = vpop.f32.mrb[0].mxu0
    %v1433 = vadd.f32 0.0, %v1432
    %v1434 = vpop.f32.mrb[0].mxu0
    %v1435 = vpop.f32.mrb[0].mxu0
    %1436 = vdwg.mxu0
    %v1437 = vadd.f32 %v219, %v1431
    %v1438 = vadd.f32 %v221, %v1433
    %v1439 = vxor.u32 %v1437, 2147483648
    %v1440 = vxor.u32 %v1438, 2147483648
    %v1441 = vmul.f32 %v1439, 1.442695
    %v1442 = vpow.pop %v1441
    %v1443 = vmul.f32 %v1440, 1.442695
    %v1444 = vpow.pop %v1443
    %v1445 = vadd.f32 %v1442, 1.0
    %v1446 = vadd.f32 %v1444, 1.0
    %v1447 = vrcp.pop %v1445
    %v1448 = vmul.f32 1.0, %v1447
    %v1449 = vrcp.pop %v1446
    %v1450 = vmul.f32 1.0, %v1449
    %v1451 = vtanh.pop %v1437
    %v1452 = vtanh.pop %v1438
    %v1453 = vsel %vm66, %v1448, %v1451
    %v1454 = vsel %vm67, %v1450, %v1452
    %v1455 = vmul.f32 %v1453, %v1264
    %1457 = vrot.lane.b32.xlu0 %v1454, 64
    %v1458 = vpop.permute.xlu0 %1457
    %v1460 = vmul.f32 %v1453, %v1458
    %1462 = vrot.lane.b32.xlu0 %v1460, 64
    %v1463 = vpop.permute.xlu0 %1462
    %v1465 = vadd.f32 %v1455, %v1463
    %v1466 = vtanh.pop %v1465
    %1468 = vrot.lane.b32.xlu0 %v1466, 64
    %v1469 = vpop.permute.xlu0 %1468
    %v1471 = vmul.f32 %v1454, %v1469
    %v1472 = vpack.c.bf16 %v1471, %v1471
    %v1473 = vpack.c.bf16 %v1395, %v1395
    %v1475 = vsel %vm295, %v1473, 0
    %1477 = vmatprep.subr.bf16.mxu0 %v417
    %1478 = vmatpush1.bf16.msra.mxu0 %v416
    %1479 = vmatprep.subr.bf16.mxu0 %v419
    %1480 = vmatpush1.bf16.msra.mxu0 %v418
    %1481 = vmatprep.subr.bf16.mxu0 %v421
    %1482 = vmatpush1.bf16.msra.mxu0 %v420
    %1483 = vmatprep.subr.bf16.mxu0 %v423
    %1484 = vmatpush1.bf16.msra.mxu0 %v422
    %1485 = vmatprep.subr.bf16.mxu0 0
    %1486 = vmatpush1.bf16.msra.mxu0 0
    %1487 = vmatprep.subr.bf16.mxu0 0
    %1488 = vmatpush1.bf16.msra.mxu0 0
    %1489 = vmatprep.subr.bf16.mxu0 0
    %1490 = vmatpush1.bf16.msra.mxu0 0
    %1491 = vmatprep.subr.bf16.mxu0 0
    %1492 = vmatpush1.bf16.msra.mxu0 0
    %1493 = vmatprep.subr.bf16.mxu0 0
    %1494 = vmatpush1.bf16.msra.mxu0 0
    %1495 = vmatprep.subr.bf16.mxu0 0
    %1496 = vmatpush1.bf16.msra.mxu0 0
    %1497 = vmatprep.subr.bf16.mxu0 0
    %1498 = vmatpush1.bf16.msra.mxu0 0
    %1499 = vmatprep.subr.bf16.mxu0 0
    %1500 = vmatpush1.bf16.msra.mxu0 0
    %1501 = vmatprep.subr.bf16.mxu0 0
    %1502 = vmatpush1.bf16.msra.mxu0 0
    %1503 = vmatprep.subr.bf16.mxu0 0
    %1504 = vmatpush1.bf16.msra.mxu0 0
    %1505 = vmatprep.subr.bf16.mxu0 0
    %1506 = vmatpush1.bf16.msra.mxu0 0
    %1507 = vmatprep.subr.bf16.mxu0 0
    %1508 = vmatpush1.bf16.msra.mxu0 0
    %1509 = vmatprep.mubr.bf16.mxu0 0
    %1510 = vmatmul.mubr.bf16.gmra.mrb[0].mxu0 %v1475
    %v1511 = vpop.f32.mrb[0].mxu0
    %v1512 = vadd.f32 0.0, %v1511
    %v1513 = vpop.f32.mrb[0].mxu0
    %v1514 = vadd.f32 0.0, %v1513
    %v1515 = vpop.f32.mrb[0].mxu0
    %v1516 = vpop.f32.mrb[0].mxu0
    %1517 = vdwg.mxu0
    %v1519 = vsel %vm295, %v1472, 0
    %1521 = vmatprep.subr.bf16.mxu0 %v498
    %1522 = vmatpush1.bf16.msra.mxu0 %v497
    %1523 = vmatprep.subr.bf16.mxu0 %v500
    %1524 = vmatpush1.bf16.msra.mxu0 %v499
    %1525 = vmatprep.subr.bf16.mxu0 %v502
    %1526 = vmatpush1.bf16.msra.mxu0 %v501
    %1527 = vmatprep.subr.bf16.mxu0 %v504
    %1528 = vmatpush1.bf16.msra.mxu0 %v503
    %1529 = vmatprep.subr.bf16.mxu0 0
    %1530 = vmatpush1.bf16.msra.mxu0 0
    %1531 = vmatprep.subr.bf16.mxu0 0
    %1532 = vmatpush1.bf16.msra.mxu0 0
    %1533 = vmatprep.subr.bf16.mxu0 0
    %1534 = vmatpush1.bf16.msra.mxu0 0
    %1535 = vmatprep.subr.bf16.mxu0 0
    %1536 = vmatpush1.bf16.msra.mxu0 0
    %1537 = vmatprep.subr.bf16.mxu0 0
    %1538 = vmatpush1.bf16.msra.mxu0 0
    %1539 = vmatprep.subr.bf16.mxu0 0
    %1540 = vmatpush1.bf16.msra.mxu0 0
    %1541 = vmatprep.subr.bf16.mxu0 0
    %1542 = vmatpush1.bf16.msra.mxu0 0
    %1543 = vmatprep.subr.bf16.mxu0 0
    %1544 = vmatpush1.bf16.msra.mxu0 0
    %1545 = vmatprep.subr.bf16.mxu0 0
    %1546 = vmatpush1.bf16.msra.mxu0 0
    %1547 = vmatprep.subr.bf16.mxu0 0
    %1548 = vmatpush1.bf16.msra.mxu0 0
    %1549 = vmatprep.subr.bf16.mxu0 0
    %1550 = vmatpush1.bf16.msra.mxu0 0
    %1551 = vmatprep.subr.bf16.mxu0 0
    %1552 = vmatpush1.bf16.msra.mxu0 0
    %1553 = vmatprep.mubr.bf16.mxu0 0
    %1554 = vmatmul.mubr.bf16.gmra.mrb[0].mxu0 %v1519
    %v1555 = vpop.f32.mrb[0].mxu0
    %v1556 = vadd.f32 %v1512, %v1555
    %v1557 = vpop.f32.mrb[0].mxu0
    %v1558 = vadd.f32 %v1514, %v1557
    %v1559 = vpop.f32.mrb[0].mxu0
    %v1560 = vpop.f32.mrb[0].mxu0
    %1561 = vdwg.mxu0
    %v1562 = vadd.f32 %v1556, %v240
    %v1563 = vadd.f32 %v1558, %v244
    %v1564 = vxor.u32 %v1562, 2147483648
    %v1565 = vxor.u32 %v1563, 2147483648
    %v1566 = vmul.f32 %v1564, 1.442695
    %v1567 = vpow.pop %v1566
    %v1568 = vmul.f32 %v1565, 1.442695
    %v1569 = vpow.pop %v1568
    %v1570 = vadd.f32 %v1567, 1.0
    %v1571 = vadd.f32 %v1569, 1.0
    %v1572 = vrcp.pop %v1570
    %v1573 = vmul.f32 1.0, %v1572
    %v1574 = vrcp.pop %v1571
    %v1575 = vmul.f32 1.0, %v1574
    %v1576 = vtanh.pop %v1562
    %v1577 = vtanh.pop %v1563
    %v1578 = vsel %vm66, %v1573, %v1576
    %v1579 = vsel %vm67, %v1575, %v1577
    %v1580 = vmul.f32 %v1578, %v1389
    %1582 = vrot.lane.b32.xlu0 %v1579, 64
    %v1583 = vpop.permute.xlu0 %1582
    %v1585 = vmul.f32 %v1578, %v1583
    %1587 = vrot.lane.b32.xlu0 %v1585, 64
    %v1588 = vpop.permute.xlu0 %1587
    %v1590 = vadd.f32 %v1580, %v1588
    %v1591 = vtanh.pop %v1590
    %1593 = vrot.lane.b32.xlu0 %v1591, 64
    %v1594 = vpop.permute.xlu0 %1593
    %v1596 = vmul.f32 %v1579, %v1594
    %1597 = vmatprep.subr.bf16.mxu0 %v280
    %1598 = vmatpush1.bf16.msra.mxu0 %v279
    %1599 = vmatprep.subr.bf16.mxu0 %v282
    %1600 = vmatpush1.bf16.msra.mxu0 %v281
    %1601 = vmatprep.subr.bf16.mxu0 %v284
    %1602 = vmatpush1.bf16.msra.mxu0 %v283
    %1603 = vmatprep.subr.bf16.mxu0 %v286
    %1604 = vmatpush1.bf16.msra.mxu0 %v285
    %1605 = vmatprep.subr.bf16.mxu0 0
    %1606 = vmatpush1.bf16.msra.mxu0 0
    %1607 = vmatprep.subr.bf16.mxu0 0
    %1608 = vmatpush1.bf16.msra.mxu0 0
    %1609 = vmatprep.subr.bf16.mxu0 0
    %1610 = vmatpush1.bf16.msra.mxu0 0
    %1611 = vmatprep.subr.bf16.mxu0 0
    %1612 = vmatpush1.bf16.msra.mxu0 0
    %1613 = vmatprep.subr.bf16.mxu0 0
    %1614 = vmatpush1.bf16.msra.mxu0 0
    %1615 = vmatprep.subr.bf16.mxu0 0
    %1616 = vmatpush1.bf16.msra.mxu0 0
    %1617 = vmatprep.subr.bf16.mxu0 0
    %1618 = vmatpush1.bf16.msra.mxu0 0
    %1619 = vmatprep.subr.bf16.mxu0 0
    %1620 = vmatpush1.bf16.msra.mxu0 0
    %1621 = vmatprep.subr.bf16.mxu0 0
    %1622 = vmatpush1.bf16.msra.mxu0 0
    %1623 = vmatprep.subr.bf16.mxu0 0
    %1624 = vmatpush1.bf16.msra.mxu0 0
    %1625 = vmatprep.subr.bf16.mxu0 0
    %1626 = vmatpush1.bf16.msra.mxu0 0
    %1627 = vmatprep.subr.bf16.mxu0 0
    %1628 = vmatpush1.bf16.msra.mxu0 0
    %1629 = vmatprep.mubr.bf16.mxu0 0
    %1630 = vmatmul.mubr.bf16.gmra.mrb[0].mxu0 %v1519
    %v1631 = vpop.f32.mrb[0].mxu0
    %v1632 = vadd.f32 0.0, %v1631
    %v1633 = vpop.f32.mrb[0].mxu0
    %v1634 = vadd.f32 0.0, %v1633
    %v1635 = vpop.f32.mrb[0].mxu0
    %v1636 = vpop.f32.mrb[0].mxu0
    %1637 = vdwg.mxu0
    %v1638 = vadd.f32 %v225, %v1632
    %v1639 = vadd.f32 %v227, %v1634
    %v1640 = vxor.u32 %v1638, 2147483648
    %v1641 = vxor.u32 %v1639, 2147483648
    %v1642 = vmul.f32 %v1640, 1.442695
    %v1643 = vpow.pop %v1642
    %v1644 = vmul.f32 %v1641, 1.442695
    %v1645 = vpow.pop %v1644
    %v1646 = vadd.f32 %v1643, 1.0
    %v1647 = vadd.f32 %v1645, 1.0
    %v1648 = vrcp.pop %v1646
    %v1649 = vmul.f32 1.0, %v1648
    %v1650 = vrcp.pop %v1647
    %v1651 = vmul.f32 1.0, %v1650
    %v1652 = vtanh.pop %v1638
    %v1653 = vtanh.pop %v1639
    %v1654 = vsel %vm66, %v1649, %v1652
    %v1655 = vsel %vm67, %v1651, %v1653
    %v1656 = vmul.f32 %v1654, %v1465
    %1658 = vrot.lane.b32.xlu0 %v1655, 64
    %v1659 = vpop.permute.xlu0 %1658
    %v1661 = vmul.f32 %v1654, %v1659
    %1663 = vrot.lane.b32.xlu0 %v1661, 64
    %v1664 = vpop.permute.xlu0 %1663
    %v1666 = vadd.f32 %v1656, %v1664
    %v1667 = vtanh.pop %v1666
    %1669 = vrot.lane.b32.xlu0 %v1667, 64
    %v1670 = vpop.permute.xlu0 %1669
    %v1672 = vmul.f32 %v1655, %v1670
    %v1673 = vpack.c.bf16 %v1672, %v1672
    %v1674 = vpack.c.bf16 %v1596, %v1596
    %v1676 = vsel %vm295, %v1674, 0
    %1678 = vmatprep.subr.bf16.mxu0 %v417
    %1679 = vmatpush1.bf16.msra.mxu0 %v416
    %1680 = vmatprep.subr.bf16.mxu0 %v419
    %1681 = vmatpush1.bf16.msra.mxu0 %v418
    %1682 = vmatprep.subr.bf16.mxu0 %v421
    %1683 = vmatpush1.bf16.msra.mxu0 %v420
    %1684 = vmatprep.subr.bf16.mxu0 %v423
    %1685 = vmatpush1.bf16.msra.mxu0 %v422
    %1686 = vmatprep.subr.bf16.mxu0 0
    %1687 = vmatpush1.bf16.msra.mxu0 0
    %1688 = vmatprep.subr.bf16.mxu0 0
    %1689 = vmatpush1.bf16.msra.mxu0 0
    %1690 = vmatprep.subr.bf16.mxu0 0
    %1691 = vmatpush1.bf16.msra.mxu0 0
    %1692 = vmatprep.subr.bf16.mxu0 0
    %1693 = vmatpush1.bf16.msra.mxu0 0
    %1694 = vmatprep.subr.bf16.mxu0 0
    %1695 = vmatpush1.bf16.msra.mxu0 0
    %1696 = vmatprep.subr.bf16.mxu0 0
    %1697 = vmatpush1.bf16.msra.mxu0 0
    %1698 = vmatprep.subr.bf16.mxu0 0
    %1699 = vmatpush1.bf16.msra.mxu0 0
    %1700 = vmatprep.subr.bf16.mxu0 0
    %1701 = vmatpush1.bf16.msra.mxu0 0
    %1702 = vmatprep.subr.bf16.mxu0 0
    %1703 = vmatpush1.bf16.msra.mxu0 0
    %1704 = vmatprep.subr.bf16.mxu0 0
    %1705 = vmatpush1.bf16.msra.mxu0 0
    %1706 = vmatprep.subr.bf16.mxu0 0
    %1707 = vmatpush1.bf16.msra.mxu0 0
    %1708 = vmatprep.subr.bf16.mxu0 0
    %1709 = vmatpush1.bf16.msra.mxu0 0
    %1710 = vmatprep.mubr.bf16.mxu0 0
    %1711 = vmatmul.mubr.bf16.gmra.mrb[0].mxu0 %v1676
    %v1712 = vpop.f32.mrb[0].mxu0
    %v1713 = vadd.f32 0.0, %v1712
    %v1714 = vpop.f32.mrb[0].mxu0
    %v1715 = vadd.f32 0.0, %v1714
    %v1716 = vpop.f32.mrb[0].mxu0
    %v1717 = vpop.f32.mrb[0].mxu0
    %1718 = vdwg.mxu0
    %v1720 = vsel %vm295, %v1673, 0
    %1722 = vmatprep.subr.bf16.mxu0 %v498
    %1723 = vmatpush1.bf16.msra.mxu0 %v497
    %1724 = vmatprep.subr.bf16.mxu0 %v500
    %1725 = vmatpush1.bf16.msra.mxu0 %v499
    %1726 = vmatprep.subr.bf16.mxu0 %v502
    %1727 = vmatpush1.bf16.msra.mxu0 %v501
    %1728 = vmatprep.subr.bf16.mxu0 %v504
    %1729 = vmatpush1.bf16.msra.mxu0 %v503
    %1730 = vmatprep.subr.bf16.mxu0 0
    %1731 = vmatpush1.bf16.msra.mxu0 0
    %1732 = vmatprep.subr.bf16.mxu0 0
    %1733 = vmatpush1.bf16.msra.mxu0 0
    %1734 = vmatprep.subr.bf16.mxu0 0
    %1735 = vmatpush1.bf16.msra.mxu0 0
    %1736 = vmatprep.subr.bf16.mxu0 0
    %1737 = vmatpush1.bf16.msra.mxu0 0
    %1738 = vmatprep.subr.bf16.mxu0 0
    %1739 = vmatpush1.bf16.msra.mxu0 0
    %1740 = vmatprep.subr.bf16.mxu0 0
    %1741 = vmatpush1.bf16.msra.mxu0 0
    %1742 = vmatprep.subr.bf16.mxu0 0
    %1743 = vmatpush1.bf16.msra.mxu0 0
    %1744 = vmatprep.subr.bf16.mxu0 0
    %1745 = vmatpush1.bf16.msra.mxu0 0
    %1746 = vmatprep.subr.bf16.mxu0 0
    %1747 = vmatpush1.bf16.msra.mxu0 0
    %1748 = vmatprep.subr.bf16.mxu0 0
    %1749 = vmatpush1.bf16.msra.mxu0 0
    %1750 = vmatprep.subr.bf16.mxu0 0
    %1751 = vmatpush1.bf16.msra.mxu0 0
    %1752 = vmatprep.subr.bf16.mxu0 0
    %1753 = vmatpush1.bf16.msra.mxu0 0
    %1754 = vmatprep.mubr.bf16.mxu0 0
    %1755 = vmatmul.mubr.bf16.gmra.mrb[0].mxu0 %v1720
    %v1756 = vpop.f32.mrb[0].mxu0
    %v1757 = vadd.f32 %v1713, %v1756
    %v1758 = vpop.f32.mrb[0].mxu0
    %v1759 = vadd.f32 %v1715, %v1758
    %v1760 = vpop.f32.mrb[0].mxu0
    %v1761 = vpop.f32.mrb[0].mxu0
    %1762 = vdwg.mxu0
    %v1763 = vadd.f32 %v1757, %v240
    %v1764 = vadd.f32 %v1759, %v244
    %v1765 = vxor.u32 %v1763, 2147483648
    %v1766 = vxor.u32 %v1764, 2147483648
    %v1767 = vmul.f32 %v1765, 1.442695
    %v1768 = vpow.pop %v1767
    %v1769 = vmul.f32 %v1766, 1.442695
    %v1770 = vpow.pop %v1769
    %v1771 = vadd.f32 %v1768, 1.0
    %v1772 = vadd.f32 %v1770, 1.0
    %v1773 = vrcp.pop %v1771
    %v1774 = vmul.f32 1.0, %v1773
    %v1775 = vrcp.pop %v1772
    %v1776 = vmul.f32 1.0, %v1775
    %v1777 = vtanh.pop %v1763
    %v1778 = vtanh.pop %v1764
    %v1779 = vsel %vm66, %v1774, %v1777
    %v1780 = vsel %vm67, %v1776, %v1778
    %v1781 = vmul.f32 %v1779, %v1590
    %1783 = vrot.lane.b32.xlu0 %v1780, 64
    %v1784 = vpop.permute.xlu0 %1783
    %v1786 = vmul.f32 %v1779, %v1784
    %1788 = vrot.lane.b32.xlu0 %v1786, 64
    %v1789 = vpop.permute.xlu0 %1788
    %v1791 = vadd.f32 %v1781, %v1789
    %v1792 = vtanh.pop %v1791
    %1794 = vrot.lane.b32.xlu0 %v1792, 64
    %v1795 = vpop.permute.xlu0 %1794
    %v1797 = vmul.f32 %v1780, %v1795
    %1798 = vmatprep.subr.bf16.mxu0 %v280
    %1799 = vmatpush1.bf16.msra.mxu0 %v279
    %1800 = vmatprep.subr.bf16.mxu0 %v282
    %1801 = vmatpush1.bf16.msra.mxu0 %v281
    %1802 = vmatprep.subr.bf16.mxu0 %v284
    %1803 = vmatpush1.bf16.msra.mxu0 %v283
    %1804 = vmatprep.subr.bf16.mxu0 %v286
    %1805 = vmatpush1.bf16.msra.mxu0 %v285
    %1806 = vmatprep.subr.bf16.mxu0 0
    %1807 = vmatpush1.bf16.msra.mxu0 0
    %1808 = vmatprep.subr.bf16.mxu0 0
    %1809 = vmatpush1.bf16.msra.mxu0 0
    %1810 = vmatprep.subr.bf16.mxu0 0
    %1811 = vmatpush1.bf16.msra.mxu0 0
    %1812 = vmatprep.subr.bf16.mxu0 0
    %1813 = vmatpush1.bf16.msra.mxu0 0
    %1814 = vmatprep.subr.bf16.mxu0 0
    %1815 = vmatpush1.bf16.msra.mxu0 0
    %1816 = vmatprep.subr.bf16.mxu0 0
    %1817 = vmatpush1.bf16.msra.mxu0 0
    %1818 = vmatprep.subr.bf16.mxu0 0
    %1819 = vmatpush1.bf16.msra.mxu0 0
    %1820 = vmatprep.subr.bf16.mxu0 0
    %1821 = vmatpush1.bf16.msra.mxu0 0
    %1822 = vmatprep.subr.bf16.mxu0 0
    %1823 = vmatpush1.bf16.msra.mxu0 0
    %1824 = vmatprep.subr.bf16.mxu0 0
    %1825 = vmatpush1.bf16.msra.mxu0 0
    %1826 = vmatprep.subr.bf16.mxu0 0
    %1827 = vmatpush1.bf16.msra.mxu0 0
    %1828 = vmatprep.subr.bf16.mxu0 0
    %1829 = vmatpush1.bf16.msra.mxu0 0
    %1830 = vmatprep.mubr.bf16.mxu0 0
    %1831 = vmatmul.mubr.bf16.gmra.mrb[0].mxu0 %v1720
    %v1832 = vpop.f32.mrb[0].mxu0
    %v1833 = vadd.f32 0.0, %v1832
    %v1834 = vpop.f32.mrb[0].mxu0
    %v1835 = vadd.f32 0.0, %v1834
    %v1836 = vpop.f32.mrb[0].mxu0
    %v1837 = vpop.f32.mrb[0].mxu0
    %1838 = vdwg.mxu0
    %v1839 = vadd.f32 %v231, %v1833
    %v1840 = vadd.f32 %v233, %v1835
    %v1841 = vxor.u32 %v1839, 2147483648
    %v1842 = vxor.u32 %v1840, 2147483648
    %v1843 = vmul.f32 %v1841, 1.442695
    %v1844 = vpow.pop %v1843
    %v1845 = vmul.f32 %v1842, 1.442695
    %v1846 = vpow.pop %v1845
    %v1847 = vadd.f32 %v1844, 1.0
    %v1848 = vadd.f32 %v1846, 1.0
    %v1849 = vrcp.pop %v1847
    %v1850 = vmul.f32 1.0, %v1849
    %v1851 = vrcp.pop %v1848
    %v1852 = vmul.f32 1.0, %v1851
    %v1853 = vtanh.pop %v1839
    %v1854 = vtanh.pop %v1840
    %v1855 = vsel %vm66, %v1850, %v1853
    %v1856 = vsel %vm67, %v1852, %v1854
    %v1857 = vmul.f32 %v1855, %v1666
    %1859 = vrot.lane.b32.xlu0 %v1856, 64
    %v1860 = vpop.permute.xlu0 %1859
    %v1862 = vmul.f32 %v1855, %v1860
    %1864 = vrot.lane.b32.xlu0 %v1862, 64
    %v1865 = vpop.permute.xlu0 %1864
    %v1867 = vadd.f32 %v1857, %v1865
    %v1868 = vtanh.pop %v1867
    %1870 = vrot.lane.b32.xlu0 %v1868, 64
    %v1871 = vpop.permute.xlu0 %1870
    %v1873 = vmul.f32 %v1856, %v1871
    %v1874 = vpack.c.bf16 %v1873, %v1873
    %v1875 = vpack.c.bf16 %v1797, %v1797
    %v1877 = vsel %vm295, %v1875, 0
    %1879 = vmatprep.subr.bf16.mxu0 %v417
    %1880 = vmatpush1.bf16.msra.mxu0 %v416
    %1881 = vmatprep.subr.bf16.mxu0 %v419
    %1882 = vmatpush1.bf16.msra.mxu0 %v418
    %1883 = vmatprep.subr.bf16.mxu0 %v421
    %1884 = vmatpush1.bf16.msra.mxu0 %v420
    %1885 = vmatprep.subr.bf16.mxu0 %v423
    %1886 = vmatpush1.bf16.msra.mxu0 %v422
    %1887 = vmatprep.subr.bf16.mxu0 0
    %1888 = vmatpush1.bf16.msra.mxu0 0
    %1889 = vmatprep.subr.bf16.mxu0 0
    %1890 = vmatpush1.bf16.msra.mxu0 0
    %1891 = vmatprep.subr.bf16.mxu0 0
    %1892 = vmatpush1.bf16.msra.mxu0 0
    %1893 = vmatprep.subr.bf16.mxu0 0
    %1894 = vmatpush1.bf16.msra.mxu0 0
    %1895 = vmatprep.subr.bf16.mxu0 0
    %1896 = vmatpush1.bf16.msra.mxu0 0
    %1897 = vmatprep.subr.bf16.mxu0 0
    %1898 = vmatpush1.bf16.msra.mxu0 0
    %1899 = vmatprep.subr.bf16.mxu0 0
    %1900 = vmatpush1.bf16.msra.mxu0 0
    %1901 = vmatprep.subr.bf16.mxu0 0
    %1902 = vmatpush1.bf16.msra.mxu0 0
    %1903 = vmatprep.subr.bf16.mxu0 0
    %1904 = vmatpush1.bf16.msra.mxu0 0
    %1905 = vmatprep.subr.bf16.mxu0 0
    %1906 = vmatpush1.bf16.msra.mxu0 0
    %1907 = vmatprep.subr.bf16.mxu0 0
    %1908 = vmatpush1.bf16.msra.mxu0 0
    %1909 = vmatprep.subr.bf16.mxu0 0
    %1910 = vmatpush1.bf16.msra.mxu0 0
    %1911 = vmatprep.mubr.bf16.mxu0 0
    %1912 = vmatmul.mubr.bf16.gmra.mrb[0].mxu0 %v1877
    %v1913 = vpop.f32.mrb[0].mxu0
    %v1914 = vadd.f32 0.0, %v1913
    %v1915 = vpop.f32.mrb[0].mxu0
    %v1916 = vadd.f32 0.0, %v1915
    %v1917 = vpop.f32.mrb[0].mxu0
    %v1918 = vpop.f32.mrb[0].mxu0
    %1919 = vdwg.mxu0
    %v1921 = vsel %vm295, %v1874, 0
    %1923 = vmatprep.subr.bf16.mxu0 %v498
    %1924 = vmatpush1.bf16.msra.mxu0 %v497
    %1925 = vmatprep.subr.bf16.mxu0 %v500
    %1926 = vmatpush1.bf16.msra.mxu0 %v499
    %1927 = vmatprep.subr.bf16.mxu0 %v502
    %1928 = vmatpush1.bf16.msra.mxu0 %v501
    %1929 = vmatprep.subr.bf16.mxu0 %v504
    %1930 = vmatpush1.bf16.msra.mxu0 %v503
    %1931 = vmatprep.subr.bf16.mxu0 0
    %1932 = vmatpush1.bf16.msra.mxu0 0
    %1933 = vmatprep.subr.bf16.mxu0 0
    %1934 = vmatpush1.bf16.msra.mxu0 0
    %1935 = vmatprep.subr.bf16.mxu0 0
    %1936 = vmatpush1.bf16.msra.mxu0 0
    %1937 = vmatprep.subr.bf16.mxu0 0
    %1938 = vmatpush1.bf16.msra.mxu0 0
    %1939 = vmatprep.subr.bf16.mxu0 0
    %1940 = vmatpush1.bf16.msra.mxu0 0
    %1941 = vmatprep.subr.bf16.mxu0 0
    %1942 = vmatpush1.bf16.msra.mxu0 0
    %1943 = vmatprep.subr.bf16.mxu0 0
    %1944 = vmatpush1.bf16.msra.mxu0 0
    %1945 = vmatprep.subr.bf16.mxu0 0
    %1946 = vmatpush1.bf16.msra.mxu0 0
    %1947 = vmatprep.subr.bf16.mxu0 0
    %1948 = vmatpush1.bf16.msra.mxu0 0
    %1949 = vmatprep.subr.bf16.mxu0 0
    %1950 = vmatpush1.bf16.msra.mxu0 0
    %1951 = vmatprep.subr.bf16.mxu0 0
    %1952 = vmatpush1.bf16.msra.mxu0 0
    %1953 = vmatprep.subr.bf16.mxu0 0
    %1954 = vmatpush1.bf16.msra.mxu0 0
    %1955 = vmatprep.mubr.bf16.mxu0 0
    %1956 = vmatmul.mubr.bf16.gmra.mrb[0].mxu0 %v1921
    %v1957 = vpop.f32.mrb[0].mxu0
    %v1958 = vadd.f32 %v1914, %v1957
    %v1959 = vpop.f32.mrb[0].mxu0
    %v1960 = vadd.f32 %v1916, %v1959
    %v1961 = vpop.f32.mrb[0].mxu0
    %v1962 = vpop.f32.mrb[0].mxu0
    %1963 = vdwg.mxu0
    %v1964 = vadd.f32 %v1958, %v240
    %v1965 = vadd.f32 %v1960, %v244
    %v1966 = vxor.u32 %v1964, 2147483648
    %v1967 = vxor.u32 %v1965, 2147483648
    %v1968 = vmul.f32 %v1966, 1.442695
    %v1969 = vpow.pop %v1968
    %v1970 = vmul.f32 %v1967, 1.442695
    %v1971 = vpow.pop %v1970
    %v1972 = vadd.f32 %v1969, 1.0
    %v1973 = vadd.f32 %v1971, 1.0
    %v1974 = vrcp.pop %v1972
    %v1975 = vmul.f32 1.0, %v1974
    %v1976 = vrcp.pop %v1973
    %v1977 = vmul.f32 1.0, %v1976
    %v1978 = vtanh.pop %v1964
    %v1979 = vtanh.pop %v1965
    %v1980 = vsel %vm66, %v1975, %v1978
    %v1981 = vsel %vm67, %v1977, %v1979
    %v1982 = vmul.f32 %v1980, %v1791
    %1984 = vrot.lane.b32.xlu0 %v1981, 64
    %v1985 = vpop.permute.xlu0 %1984
    %v1987 = vmul.f32 %v1980, %v1985
    %1989 = vrot.lane.b32.xlu0 %v1987, 64
    %v1990 = vpop.permute.xlu0 %1989
    %v1992 = vadd.f32 %v1982, %v1990
    %v1993 = vtanh.pop %v1992
    %1995 = vrot.lane.b32.xlu0 %v1993, 64
    %v1996 = vpop.permute.xlu0 %1995
    %v1998 = vmul.f32 %v1981, %v1996
    %v1999 = vld [vmem:[%s7] sm:$0x1]
    %v2001 = vlaneseq
    %v2002 = vshrl.u32 %v2001, 7
    %v2003 = vsub.s32 0, %v2002
    %v2004 = vrot.slane %v1999, %v2003
    %v2006 = vmul.f32 %v1998, %v2004
    %v2007 = vsel %vm295, %v2006, 0.0
    %2008 = vadd.xlane.f32.xlu0 %v2007
    %v2009 = vpop.xlane.xlu0 %2008
    %v2010 = vld [vmem:[#allocation2] sm:$0x1]
    %v2012 = vlaneseq
    %v2013 = vshrl.u32 %v2012, 7
    %v2014 = vsub.s32 0, %v2013
    %v2015 = vrot.slane %v2010, %v2014
    %v2017 = vadd.f32 %v2009, %v2015
    %vm2018 = vcmask 7168
    %2019 = vst.msk [vmem:[%s9] sm:$0xff] %vm2018, %v2017
    // Predicated region
    $region46: #{tpu_custom_call.1} parent=1 // pred_check
      _
    $region47: #{tpu_custom_call.1} parent=1 // pred_check_branch
      %2021 = sbr.rel (0) target = $region49
    $region48: #{tpu_custom_call.1} parent=1 // pred_region
      _
    $region49: #{tpu_custom_call.1} parent=1 // pred_fallthru
      _
    // Predicated region
    $region50: #{tpu_custom_call.1} parent=1 // pred_check
      _
    $region51: #{tpu_custom_call.1} parent=1 // pred_check_branch
      %2023 = sbr.rel (0) target = $region53
    $region52: #{tpu_custom_call.1} parent=1 // pred_region
      _
    $region53: #{tpu_custom_call.1} parent=1 // pred_fallthru
      _
    %2024 = vsyncpa [#allocation4], 1
    %2025 = vsyncpa [#allocation6], 1

</llo_original>
